<compile_context>
chip_gen: v6e
topology: v6e:2x2x1
jax: 0.10.0
libtpu: 0.0.40
codegen_flags: <defaults>
</compile_context>

<pallas_src>
import functools

import jax
import jax.numpy as jnp
from jax.experimental import pallas as pl
from jax.experimental.pallas import tpu as pltpu


C_STEM = 48        # efficientnet_b5 stem conv output channels
C_FEAT = 2048      # efficientnet_b5 feature width
C_OUT = 1000       # torchvision classifier output (1000 logits)
C_OUT_PAD = 1024   # lane-dense padded classifier width
TK_HEAD = 256      # k-tile for the head weight stream


def _round_up(x, m):
    return (x + m - 1) // m * m


# ----------------------------------------------------------------------------
# Kernel 1: lane-dense im2col stem conv + bias + SiLU with FUSED global
#           average pool.
#   patches: (B, 27, S_pad)  -- spatial on the lane axis
#   grid = (B, S_pad // ts); the (1, C_STEM, 1) output block stays resident
#   across the (last, "arbitrary") spatial axis and is the pooling accumulator.
# ----------------------------------------------------------------------------
def _stem_pool_kernel(p_ref, w_ref, b_ref, out_ref, *, valid_s, ts, inv_s):
    s = pl.program_id(1)
    s_last = pl.num_programs(1) - 1

    @pl.when(s == 0)
    def _init():
        out_ref[...] = jnp.zeros_like(out_ref)

    p = p_ref[0]                                                      # (27, ts) bf16
    acc = jnp.dot(w_ref[...], p, preferred_element_type=jnp.float32)  # (48, ts) f32
    acc = acc + b_ref[...]                                            # (48, 1) bias
    act = acc * jax.nn.sigmoid(acc)                                   # SiLU in f32

    # Full tiles: no padded lanes -> accumulate the lane-reduce directly.
    @pl.when(s != s_last)
    def _acc_full():
        out_ref[...] += jnp.sum(act, axis=-1, keepdims=True).reshape(1, C_STEM, 1)

    # Last tile: mask padded lanes (they would otherwise contribute
    # SiLU(bias) != 0), accumulate, and finalize the mean.
    @pl.when(s == s_last)
    def _acc_tail_and_finalize():
        col = s * ts + jax.lax.broadcasted_iota(jnp.int32, (1, ts), 1)
        masked = jnp.where(col < valid_s, act, 0.0)
        out_ref[...] += jnp.sum(masked, axis=-1, keepdims=True).reshape(1, C_STEM, 1)
        out_ref[...] = out_ref[...] * inv_s


# ----------------------------------------------------------------------------
# Kernel 2: head -- pooled (B, 48) -> Linear(48, 2048) + SiLU -> Linear(2048, 1024)
#   tiled over K = C_FEAT so both weight matrices stream through VMEM; the f32
#   (B, 1024) logits accumulator lives in the output block across the k axis.
# ----------------------------------------------------------------------------
def _head_kernel(pooled_ref, w1_ref, b1_ref, w2_ref, b2_ref, out_ref):
    k = pl.program_id(0)

    @pl.when(k == 0)
    def _init():
        out_ref[...] = jnp.broadcast_to(b2_ref[...], out_ref.shape)

    pooled = pooled_ref[...].astype(jnp.bfloat16)                          # (B, 48)
    h = jnp.dot(pooled, w1_ref[...], preferred_element_type=jnp.float32)   # (B, tk)
    h = h + b1_ref[...]
    h = h * jax.nn.sigmoid(h)                                              # SiLU in f32
    out_ref[...] += jnp.dot(h.astype(jnp.bfloat16), w2_ref[...],
                            preferred_element_type=jnp.float32)            # (B, 1024)


# ----------------------------------------------------------------------------
# Glue (plain JAX): lane-dense im2col taps for the 3x3 / stride-2 / pad-1 stem
# conv.  Output spatial size matches PyTorch Conv2d: Ho = ceil(H/2), Wo = ceil(W/2).
# Returns patches of shape (B, 27, S) with the spatial axis LAST (lane-dense).
# ----------------------------------------------------------------------------
def _extract_patches_3x3_s2(x_nhwc):
    B, H, W, C = x_nhwc.shape
    Ho, Wo = (H + 1) // 2, (W + 1) // 2
    xp = jnp.pad(x_nhwc, ((0, 0), (1, 1), (1, 1), (0, 0)))
    taps = []
    for ky in range(3):
        for kx in range(3):
            taps.append(xp[:, ky:ky + 2 * Ho:2, kx:kx + 2 * Wo:2, :])
    p = jnp.concatenate(taps, axis=-1)                      # (B, Ho, Wo, 9*C)
    p = p.reshape(B, Ho * Wo, 9 * C)                        # (B, S, 27)
    p = jnp.transpose(p, (0, 2, 1))                         # (B, 27, S) lane-dense
    return p, Ho * Wo


# ----------------------------------------------------------------------------
# Model wrapper
# ----------------------------------------------------------------------------
def init_params(key):
    ks = jax.random.split(key, 6)
    s = 0.05
    return {
        # lane-dense stem weight: (C_out, 9*C_in) = (48, 27)
        "w_stem": (jax.random.normal(ks[0], (C_STEM, 27), jnp.float32) * s).astype(jnp.bfloat16),
        "b_stem": jax.random.normal(ks[1], (C_STEM, 1), jnp.float32) * s,
        "w_feat": (jax.random.normal(ks[2], (C_STEM, C_FEAT), jnp.float32) * s).astype(jnp.bfloat16),
        "b_feat": jax.random.normal(ks[3], (1, C_FEAT), jnp.float32) * s,
        # classifier padded to 1024 lanes; columns >= 1000 are sliced off.
        "w_cls": (jax.random.normal(ks[4], (C_FEAT, C_OUT_PAD), jnp.float32) * s).astype(jnp.bfloat16),
        "b_cls": jax.random.normal(ks[5], (1, C_OUT_PAD), jnp.float32) * s,
    }


def cnn_encoder_forward(image_nchw, params):
    # NCHW (PyTorch) -> NHWC for the TPU kernel path.
    x = jnp.transpose(image_nchw, (0, 2, 3, 1)).astype(jnp.float32)
    B = x.shape[0]

    patches, S = _extract_patches_3x3_s2(x)                 # (B, 27, S)
    K = patches.shape[1]                                    # 27

    # Spatial tiling: ts is a multiple of 128 (lane-dense last axis), capped at
    # 8192 so each grid step moves a few hundred KB (amortizes the ~0.35 us
    # per-step pipeline overhead).  Padded lanes are masked only on the last tile.
    ts = min(8192, _round_up(S, 128))
    s_pad = _round_up(S, ts)
    if s_pad != S:
        patches = jnp.pad(patches, ((0, 0), (0, 0), (0, s_pad - S)))
    patches = patches.astype(jnp.bfloat16)
    n_s = s_pad // ts

    stem = functools.partial(_stem_pool_kernel, valid_s=S, ts=ts, inv_s=1.0 / S)
    pooled = pl.pallas_call(
        stem,
        out_shape=jax.ShapeDtypeStruct((B, C_STEM, 1), jnp.float32),
        grid=(B, n_s),
        in_specs=[
            pl.BlockSpec((1, K, ts), lambda b, s: (b, 0, s)),
            pl.BlockSpec((C_STEM, K), lambda b, s: (0, 0)),
            pl.BlockSpec((C_STEM, 1), lambda b, s: (0, 0)),
        ],
        out_specs=pl.BlockSpec((1, C_STEM, 1), lambda b, s: (b, 0, 0)),
        compiler_params=pltpu.CompilerParams(
            dimension_semantics=("parallel", "arbitrary")),
    )(patches, params["w_stem"], params["b_stem"])

    pooled = pooled.reshape(B, C_STEM)

    # Head: grid over K = C_FEAT so the ~4 MB of weights stream through VMEM.
    n_k = C_FEAT // TK_HEAD
    logits_pad = pl.pallas_call(
        _head_kernel,
        out_shape=jax.ShapeDtypeStruct((B, C_OUT_PAD), jnp.float32),
        grid=(n_k,),
        in_specs=[
            pl.BlockSpec((B, C_STEM), lambda k: (0, 0)),
            pl.BlockSpec((C_STEM, TK_HEAD), lambda k: (0, k)),
            pl.BlockSpec((1, TK_HEAD), lambda k: (0, k)),
            pl.BlockSpec((TK_HEAD, C_OUT_PAD), lambda k: (k, 0)),
            pl.BlockSpec((1, C_OUT_PAD), lambda k: (0, 0)),
        ],
        out_specs=pl.BlockSpec((B, C_OUT_PAD), lambda k: (0, 0)),
        compiler_params=pltpu.CompilerParams(
            dimension_semantics=("arbitrary",)),
    )(pooled, params["w_feat"], params["b_feat"], params["w_cls"], params["b_cls"])

    return logits_pad[:, :C_OUT]


# ----------------------------------------------------------------------------
if __name__ == "__main__":
    key = jax.random.PRNGKey(0)
    k_img, k_params = jax.random.split(key)

    # Small NCHW RGB image consistent with the module's conv input convention.
    image = jax.random.normal(k_img, (2, 3, 16, 16), dtype=jnp.float32)
    params = init_params(k_params)

    fwd = jax.jit(cnn_encoder_forward)
    out = fwd(image, params)
    out = jax.block_until_ready(out)
    assert out.shape == (2, C_OUT), out.shape
    print("KERNEL_OK")
</pallas_src>

<mosaic_0001>
module attributes {stable_mosaic.version = 11 : i64} {
  func.func @_head_kernel(%arg0: i32, %arg1: memref<2x48xf32, #tpu.memory_space<vmem>>, %arg2: memref<48x256xbf16, #tpu.memory_space<vmem>>, %arg3: memref<1x256xf32, #tpu.memory_space<vmem>>, %arg4: memref<256x1024xbf16, #tpu.memory_space<vmem>>, %arg5: memref<1x1024xf32, #tpu.memory_space<vmem>>, %arg6: memref<2x1024xf32, #tpu.memory_space<vmem>>) attributes {dimension_semantics = [#tpu.dimension_semantics<arbitrary>], iteration_bounds = array<i64: 8>, scalar_prefetch = 0 : i64, scratch_operands = 0 : i64, tpu.core_type = #tpu.core_type<tc>, window_params = [{pipeline_mode = #tpu.pipeline_mode<synchronous>, transform_indices = @transform_0, window_bounds = array<i64: 2, 48>}, {transform_indices = @transform_1, window_bounds = array<i64: 48, 256>}, {transform_indices = @transform_2, window_bounds = array<i64: 1, 256>}, {transform_indices = @transform_3, window_bounds = array<i64: 256, 1024>}, {pipeline_mode = #tpu.pipeline_mode<synchronous>, transform_indices = @transform_4, window_bounds = array<i64: 1, 1024>}, {pipeline_mode = #tpu.pipeline_mode<synchronous>, transform_indices = @transform_5, window_bounds = array<i64: 2, 1024>}]} {
    %c0_i32 = arith.constant 0 : i32
    %0 = arith.cmpi eq, %arg0, %c0_i32 : i32
    %1 = arith.extui %0 : i1 to i32
    %c0_i32_0 = arith.constant 0 : i32
    %2 = arith.cmpi ne, %1, %c0_i32_0 : i32
    scf.if %2 {
      %c0_14 = arith.constant 0 : index
      %c0_15 = arith.constant 0 : index
      %22 = vector.load %arg5[%c0_14, %c0_15] : memref<1x1024xf32, #tpu.memory_space<vmem>>, vector<1x1024xf32>
      %23 = vector.shape_cast %22 : vector<1x1024xf32> to vector<1x1024xf32>
      %24 = vector.broadcast %23 : vector<1x1024xf32> to vector<2x1024xf32>
      %c0_16 = arith.constant 0 : index
      %c0_17 = arith.constant 0 : index
      %25 = vector.load %arg6[%c0_16, %c0_17] : memref<2x1024xf32, #tpu.memory_space<vmem>>, vector<2x1024xf32>
      tpu.vector_store %arg6[%c0_16, %c0_17], %24 {strides = array<i32>} : memref<2x1024xf32, #tpu.memory_space<vmem>>, vector<2x1024xf32>,
    } else {
    }
    %c0 = arith.constant 0 : index
    %c0_1 = arith.constant 0 : index
    %3 = vector.load %arg1[%c0, %c0_1] : memref<2x48xf32, #tpu.memory_space<vmem>>, vector<2x48xf32>
    %4 = arith.truncf %3 : vector<2x48xf32> to vector<2x48xbf16>
    %c0_2 = arith.constant 0 : index
    %c0_3 = arith.constant 0 : index
    %5 = vector.load %arg2[%c0_2, %c0_3] : memref<48x256xbf16, #tpu.memory_space<vmem>>, vector<48x256xbf16>
    %cst = arith.constant dense<0.000000e+00> : vector<2x256xf32>
    %6 = tpu.matmul %4, %5, %cst {dimension_numbers = #tpu.dot_dimension_numbers<[1], [0], [0], [1], [0, 0, 1, 1], [], []>} : vector<2x48xbf16>, vector<48x256xbf16>, vector<2x256xf32> -> vector<2x256xf32>
    %c0_4 = arith.constant 0 : index
    %c0_5 = arith.constant 0 : index
    %7 = vector.load %arg3[%c0_4, %c0_5] : memref<1x256xf32, #tpu.memory_space<vmem>>, vector<1x256xf32>
    %8 = vector.broadcast %7 : vector<1x256xf32> to vector<2x256xf32>
    %9 = arith.addf %6, %8 : vector<2x256xf32>
    %10 = arith.negf %9 : vector<2x256xf32>
    %11 = math.exp %10 : vector<2x256xf32>
    %cst_6 = arith.constant 1.000000e+00 : f32
    %12 = vector.broadcast %cst_6 : f32 to vector<2x256xf32>
    %13 = arith.addf %12, %11 : vector<2x256xf32>
    %14 = arith.divf %12, %13 : vector<2x256xf32>
    %15 = arith.mulf %9, %14 : vector<2x256xf32>
    %c0_7 = arith.constant 0 : index
    %c0_8 = arith.constant 0 : index
    %16 = vector.load %arg6[%c0_7, %c0_8] : memref<2x1024xf32, #tpu.memory_space<vmem>>, vector<2x1024xf32>
    %17 = arith.truncf %15 : vector<2x256xf32> to vector<2x256xbf16>
    %c0_9 = arith.constant 0 : index
    %c0_10 = arith.constant 0 : index
    %18 = vector.load %arg4[%c0_9, %c0_10] : memref<256x1024xbf16, #tpu.memory_space<vmem>>, vector<256x1024xbf16>
    %cst_11 = arith.constant dense<0.000000e+00> : vector<2x1024xf32>
    %19 = tpu.matmul %17, %18, %cst_11 {dimension_numbers = #tpu.dot_dimension_numbers<[1], [0], [0], [1], [0, 0, 1, 1], [], []>} : vector<2x256xbf16>, vector<256x1024xbf16>, vector<2x1024xf32> -> vector<2x1024xf32>
    %20 = arith.addf %16, %19 : vector<2x1024xf32>
    %c0_12 = arith.constant 0 : index
    %c0_13 = arith.constant 0 : index
    %21 = vector.load %arg6[%c0_12, %c0_13] : memref<2x1024xf32, #tpu.memory_space<vmem>>, vector<2x1024xf32>
    tpu.vector_store %arg6[%c0_12, %c0_13], %20 {strides = array<i32>} : memref<2x1024xf32, #tpu.memory_space<vmem>>, vector<2x1024xf32>,
    return
  }
  func.func @transform_0(%arg0: i32) -> (i32, i32) {
    %c0_i32 = arith.constant 0 : i32
    %c0_i32_0 = arith.constant 0 : i32
    %c0_i32_1 = arith.constant 0 : i32
    return %c0_i32, %c0_i32_0 : i32, i32
  }
  func.func @transform_1(%arg0: i32) -> (i32, i32) {
    %c0_i32 = arith.constant 0 : i32
    %c0_i32_0 = arith.constant 0 : i32
    return %c0_i32, %arg0 : i32, i32
  }
  func.func @transform_2(%arg0: i32) -> (i32, i32) {
    %c0_i32 = arith.constant 0 : i32
    %c0_i32_0 = arith.constant 0 : i32
    return %c0_i32, %arg0 : i32, i32
  }
  func.func @transform_3(%arg0: i32) -> (i32, i32) {
    %c0_i32 = arith.constant 0 : i32
    %c0_i32_0 = arith.constant 0 : i32
    return %arg0, %c0_i32 : i32, i32
  }
  func.func @transform_4(%arg0: i32) -> (i32, i32) {
    %c0_i32 = arith.constant 0 : i32
    %c0_i32_0 = arith.constant 0 : i32
    %c0_i32_1 = arith.constant 0 : i32
    return %c0_i32, %c0_i32_0 : i32, i32
  }
  func.func @transform_5(%arg0: i32) -> (i32, i32) {
    %c0_i32 = arith.constant 0 : i32
    %c0_i32_0 = arith.constant 0 : i32
    %c0_i32_1 = arith.constant 0 : i32
    return %c0_i32, %c0_i32_0 : i32, i32
  }
}

module attributes {stable_mosaic.version = 11 : i64} {
  func.func @_stem_pool_kernel(%arg0: i32, %arg1: i32, %arg2: memref<1x27x128xbf16, #tpu.memory_space<vmem>>, %arg3: memref<48x27xbf16, #tpu.memory_space<vmem>>, %arg4: memref<48x1xf32, #tpu.memory_space<vmem>>, %arg5: memref<1x48x1xf32, #tpu.memory_space<vmem>>) attributes {dimension_semantics = [#tpu.dimension_semantics<parallel>, #tpu.dimension_semantics<arbitrary>], iteration_bounds = array<i64: 2, 1>, scalar_prefetch = 0 : i64, scratch_operands = 0 : i64, tpu.core_type = #tpu.core_type<tc>, window_params = [{transform_indices = @transform_0, window_bounds = array<i64: 1, 27, 128>}, {pipeline_mode = #tpu.pipeline_mode<synchronous>, transform_indices = @transform_1, window_bounds = array<i64: 48, 27>}, {pipeline_mode = #tpu.pipeline_mode<synchronous>, transform_indices = @transform_2, window_bounds = array<i64: 48, 1>}, {transform_indices = @transform_3, window_bounds = array<i64: 1, 48, 1>}]} {
    %c0_i32 = arith.constant 0 : i32
    %0 = arith.cmpi eq, %arg1, %c0_i32 : i32
    %1 = arith.extui %0 : i1 to i32
    %c0_i32_0 = arith.constant 0 : i32
    %2 = arith.cmpi ne, %1, %c0_i32_0 : i32
    scf.if %2 {
      %cst_12 = arith.constant 0.000000e+00 : f32
      %22 = vector.broadcast %cst_12 : f32 to vector<1x48x1xf32>
      %c0_13 = arith.constant 0 : index
      %c0_14 = arith.constant 0 : index
      %c0_15 = arith.constant 0 : index
      %23 = vector.load %arg5[%c0_13, %c0_14, %c0_15] : memref<1x48x1xf32, #tpu.memory_space<vmem>>, vector<1x48x1xf32>
      tpu.vector_store %arg5[%c0_13, %c0_14, %c0_15], %22 {strides = array<i32>} : memref<1x48x1xf32, #tpu.memory_space<vmem>>, vector<1x48x1xf32>,
    } else {
    }
    %c0 = arith.constant 0 : index
    %c0_1 = arith.constant 0 : index
    %c0_2 = arith.constant 0 : index
    %3 = vector.load %arg2[%c0, %c0_1, %c0_2] : memref<1x27x128xbf16, #tpu.memory_space<vmem>>, vector<1x27x128xbf16>
    %4 = vector.shape_cast %3 : vector<1x27x128xbf16> to vector<27x128xbf16>
    %c0_3 = arith.constant 0 : index
    %c0_4 = arith.constant 0 : index
    %5 = vector.load %arg3[%c0_3, %c0_4] : memref<48x27xbf16, #tpu.memory_space<vmem>>, vector<48x27xbf16>
    %cst = arith.constant dense<0.000000e+00> : vector<48x128xf32>
    %6 = tpu.matmul %5, %4, %cst {dimension_numbers = #tpu.dot_dimension_numbers<[1], [0], [0], [1], [0, 0, 1, 1], [], []>} : vector<48x27xbf16>, vector<27x128xbf16>, vector<48x128xf32> -> vector<48x128xf32>
    %c0_5 = arith.constant 0 : index
    %c0_6 = arith.constant 0 : index
    %7 = vector.load %arg4[%c0_5, %c0_6] : memref<48x1xf32, #tpu.memory_space<vmem>>, vector<48x1xf32>
    %8 = vector.broadcast %7 : vector<48x1xf32> to vector<48x128xf32>
    %9 = arith.addf %6, %8 : vector<48x128xf32>
    %10 = arith.negf %9 : vector<48x128xf32>
    %11 = math.exp %10 : vector<48x128xf32>
    %cst_7 = arith.constant 1.000000e+00 : f32
    %12 = vector.broadcast %cst_7 : f32 to vector<48x128xf32>
    %13 = arith.addf %12, %11 : vector<48x128xf32>
    %14 = arith.divf %12, %13 : vector<48x128xf32>
    %15 = arith.mulf %9, %14 : vector<48x128xf32>
    %c0_i32_8 = arith.constant 0 : i32
    %16 = arith.cmpi ne, %arg1, %c0_i32_8 : i32
    %17 = arith.extui %16 : i1 to i32
    %c0_i32_9 = arith.constant 0 : i32
    %18 = arith.cmpi ne, %17, %c0_i32_9 : i32
    scf.if %18 {
      %c0_12 = arith.constant 0 : index
      %c0_13 = arith.constant 0 : index
      %c0_14 = arith.constant 0 : index
      %22 = vector.load %arg5[%c0_12, %c0_13, %c0_14] : memref<1x48x1xf32, #tpu.memory_space<vmem>>, vector<1x48x1xf32>
      %cst_15 = arith.constant dense<0.000000e+00> : vector<48xf32>
      %23 = vector.multi_reduction <add>, %15, %cst_15 [1] : vector<48x128xf32> to vector<48xf32>
      %24 = vector.shape_cast %23 : vector<48xf32> to vector<48x1xf32>
      %25 = vector.shape_cast %24 : vector<48x1xf32> to vector<1x48x1xf32>
      %26 = arith.addf %22, %25 : vector<1x48x1xf32>
      %c0_16 = arith.constant 0 : index
      %c0_17 = arith.constant 0 : index
      %c0_18 = arith.constant 0 : index
      %27 = vector.load %arg5[%c0_16, %c0_17, %c0_18] : memref<1x48x1xf32, #tpu.memory_space<vmem>>, vector<1x48x1xf32>
      tpu.vector_store %arg5[%c0_16, %c0_17, %c0_18], %26 {strides = array<i32>} : memref<1x48x1xf32, #tpu.memory_space<vmem>>, vector<1x48x1xf32>,
    } else {
    }
    %c0_i32_10 = arith.constant 0 : i32
    %19 = arith.cmpi eq, %arg1, %c0_i32_10 : i32
    %20 = arith.extui %19 : i1 to i32
    %c0_i32_11 = arith.constant 0 : i32
    %21 = arith.cmpi ne, %20, %c0_i32_11 : i32
    scf.if %21 {
      %c128_i32 = arith.constant 128 : i32
      %22 = arith.muli %arg1, %c128_i32 : i32
      %23 = tpu.iota {dimensions = array<i32: 1>} : vector<1x128xi32>
      %24 = vector.broadcast %22 : i32 to vector<1x128xi32>
      %25 = arith.addi %24, %23 : vector<1x128xi32>
      %c64_i32 = arith.constant 64 : i32
      %26 = vector.broadcast %c64_i32 : i32 to vector<1x128xi32>
      %27 = arith.cmpi slt, %25, %26 : vector<1x128xi32>
      %cst_12 = arith.constant 0.000000e+00 : f32
      %28 = vector.shape_cast %27 : vector<1x128xi1> to vector<1x128xi1>
      %29 = vector.broadcast %28 : vector<1x128xi1> to vector<48x128xi1>
      %30 = vector.broadcast %cst_12 : f32 to vector<48x128xf32>
      %31 = arith.select %29, %15, %30 : vector<48x128xi1>, vector<48x128xf32>
      %c0_13 = arith.constant 0 : index
      %c0_14 = arith.constant 0 : index
      %c0_15 = arith.constant 0 : index
      %32 = vector.load %arg5[%c0_13, %c0_14, %c0_15] : memref<1x48x1xf32, #tpu.memory_space<vmem>>, vector<1x48x1xf32>
      %cst_16 = arith.constant dense<0.000000e+00> : vector<48xf32>
      %33 = vector.multi_reduction <add>, %31, %cst_16 [1] : vector<48x128xf32> to vector<48xf32>
      %34 = vector.shape_cast %33 : vector<48xf32> to vector<48x1xf32>
      %35 = vector.shape_cast %34 : vector<48x1xf32> to vector<1x48x1xf32>
      %36 = arith.addf %32, %35 : vector<1x48x1xf32>
      %c0_17 = arith.constant 0 : index
      %c0_18 = arith.constant 0 : index
      %c0_19 = arith.constant 0 : index
      %37 = vector.load %arg5[%c0_17, %c0_18, %c0_19] : memref<1x48x1xf32, #tpu.memory_space<vmem>>, vector<1x48x1xf32>
      tpu.vector_store %arg5[%c0_17, %c0_18, %c0_19], %36 {strides = array<i32>} : memref<1x48x1xf32, #tpu.memory_space<vmem>>, vector<1x48x1xf32>,
      %c0_20 = arith.constant 0 : index
      %c0_21 = arith.constant 0 : index
      %c0_22 = arith.constant 0 : index
      %38 = vector.load %arg5[%c0_20, %c0_21, %c0_22] : memref<1x48x1xf32, #tpu.memory_space<vmem>>, vector<1x48x1xf32>
      %cst_23 = arith.constant 1.562500e-02 : f32
      %39 = vector.broadcast %cst_23 : f32 to vector<1x48x1xf32>
      %40 = arith.mulf %38, %39 : vector<1x48x1xf32>
      %c0_24 = arith.constant 0 : index
      %c0_25 = arith.constant 0 : index
      %c0_26 = arith.constant 0 : index
      %41 = vector.load %arg5[%c0_24, %c0_25, %c0_26] : memref<1x48x1xf32, #tpu.memory_space<vmem>>, vector<1x48x1xf32>
      tpu.vector_store %arg5[%c0_24, %c0_25, %c0_26], %40 {strides = array<i32>} : memref<1x48x1xf32, #tpu.memory_space<vmem>>, vector<1x48x1xf32>,
    } else {
    }
    return
  }
  func.func @transform_0(%arg0: i32, %arg1: i32) -> (i32, i32, i32) {
    %c0_i32 = arith.constant 0 : i32
    %c0_i32_0 = arith.constant 0 : i32
    return %arg0, %c0_i32, %arg1 : i32, i32, i32
  }
  func.func @transform_1(%arg0: i32, %arg1: i32) -> (i32, i32) {
    %c0_i32 = arith.constant 0 : i32
    %c0_i32_0 = arith.constant 0 : i32
    %c0_i32_1 = arith.constant 0 : i32
    return %c0_i32, %c0_i32_0 : i32, i32
  }
  func.func @transform_2(%arg0: i32, %arg1: i32) -> (i32, i32) {
    %c0_i32 = arith.constant 0 : i32
    %c0_i32_0 = arith.constant 0 : i32
    %c0_i32_1 = arith.constant 0 : i32
    return %c0_i32, %c0_i32_0 : i32, i32
  }
  func.func @transform_3(%arg0: i32, %arg1: i32) -> (i32, i32, i32) {
    %c0_i32 = arith.constant 0 : i32
    %c0_i32_0 = arith.constant 0 : i32
    %c0_i32_1 = arith.constant 0 : i32
    return %arg0, %c0_i32, %c0_i32_0 : i32, i32, i32
  }
}

</mosaic_0001>

<llo_original>
// kernel: cnn_encoder_forward.2
$region0: #{cnn_encoder_forward.2}
  #allocation0 [shape = 'u32[]', space=smem, size = 0x4, offset = 0x4, fixed_abs, tag = 'smem constant byte address 0x4 - core index']
  #allocation1 [shape = 'u32[144,128]{1,0:T(1,128)}', space=vmem, size = 0x12000, scoped, tag = 'internal scratch']
  %s0 = inlined_call_operand.vmem [shape: bf16[2,27,128], index: 0, kind: input, shape index: {}]
  %s1 = inlined_call_operand.vmem [shape: bf16[48,27], index: 1, kind: input, shape index: {}]
  %s2 = inlined_call_operand.vmem [shape: f32[48,1], index: 2, kind: input, shape index: {}]
  %s3 = inlined_call_operand.vmem [shape: f32[2,48,1], index: 3, kind: output, shape index: {}]
  %s4 = sld [smem:[#allocation0]]
  $region57: #{cnn_encoder_forward.2} parent=0
    _
  %s6 = ssub.s32 1, %s4
  %s7 = scalar_select 0, %s6, %s4
  loop: start=0, step=1, limit=4
  $region2: #{cnn_encoder_forward.2} parent=0 // loop_pre_header
    _
  $region3: #{cnn_encoder_forward.2} parent=0 // loop_header
    %s9 = sphi 0, %s13
    %p10 = scmp.ge.s32.totalorder %s9, 4
    %s16 = sphi 0, %s28
    %s17 = sphi 0, %s24
    %s18 = sphi 0, %s16
    %s19 = sphi 0, %s17
    %s20 = sphi 0, %s18
    %s21 = sphi 0, %s19
    %s33 = sphi 0, %s35
    %s36 = sphi 0, %s33
    %s37 = sphi 0, %s36
    %s53 = sphi 0, %s37
    %s57 = sphi 0, %s57
    %s59 = sphi 0, %s57
    %s60 = sphi 0, %s59
    %s74 = sphi 0, %s60
    %s78 = sphi 0, %s78
    %s80 = sphi 0, %s78
    %s81 = sphi 0, %s80
    %s95 = sphi 0, %s81
    %s101 = sphi 0, %s103
    %s104 = sphi 0, %s101
    %s105 = sphi 0, %s104
    %s121 = sphi 0, %s105
  $region4: #{cnn_encoder_forward.2} parent=0 // loop_header_branch
    %12 = sbr.rel (%p10) target = $region8
  $region5: #{cnn_encoder_forward.2} parent=0 // loop_body
    %s14 = ssub.s32 %s9, 1
    %s15 = ssub.s32 %s9, 2
    %s22 = sadd.s32 1, %s17
    %p23 = scmp.ge.s32.totalorder %s22, 1
    %s24 = scalar_select %p23, 0, %s22
    %s25 = sadd.s32 1, %s16
    %s26 = scalar_select %p23, %s25, %s16
    %p27 = scmp.ge.s32.totalorder %s26, 2
    %s28 = scalar_select %p27, 0, %s26
    %s29 = ssub.s32 %s16, %s28
    %s30 = ssub.s32 %s17, %s24
    %s31 = sor.u32 %s29, %s30
    %p32 = scmp.eq.s32.totalorder %s31, 0
    %s34 = sadd.s32 %s33, 1
    %s35 = scalar_select %p32, %s33, %s34
    %p38 = pneg %p32
    %p39 = scmp.eq.s32.totalorder %s9, 1
    %p40 = por %p38, %p39
    %p41 = scmp.ne.s32.totalorder %s33, %s36
    %p42 = scmp.eq.s32.totalorder %s9, 0
    %p43 = por %p41, %p42
    %p44 = scmp.ne.s32.totalorder %s33, %s36
    %p45 = scmp.eq.s32.totalorder %s14, 1
    %p46 = por %p44, %p45
    %p47 = scmp.ne.s32.totalorder %s36, %s37
    %p48 = scmp.eq.s32.totalorder %s14, 0
    %p49 = por %p47, %p48
    %p50 = scmp.ne.s32.totalorder %s36, %s37
    %p51 = scmp.eq.s32.totalorder %s15, 1
    %p52 = por %p50, %p51
    %p54 = scmp.ne.s32.totalorder %s37, %s53
    %p55 = scmp.eq.s32.totalorder %s15, 0
    %p56 = por %p54, %p55
    %s58 = sadd.s32 %s57, 1
    %p61 = scmp.eq.s32.totalorder %s9, 1
    %p62 = scmp.ne.s32.totalorder %s57, %s59
    %p63 = scmp.eq.s32.totalorder %s9, 0
    %p64 = por %p62, %p63
    %p65 = scmp.ne.s32.totalorder %s57, %s59
    %p66 = scmp.eq.s32.totalorder %s14, 1
    %p67 = por %p65, %p66
    %p68 = scmp.ne.s32.totalorder %s59, %s60
    %p69 = scmp.eq.s32.totalorder %s14, 0
    %p70 = por %p68, %p69
    %p71 = scmp.ne.s32.totalorder %s59, %s60
    %p72 = scmp.eq.s32.totalorder %s15, 1
    %p73 = por %p71, %p72
    %p75 = scmp.ne.s32.totalorder %s60, %s74
    %p76 = scmp.eq.s32.totalorder %s15, 0
    %p77 = por %p75, %p76
    %s79 = sadd.s32 %s78, 1
    %p82 = scmp.eq.s32.totalorder %s9, 1
    %p83 = scmp.ne.s32.totalorder %s78, %s80
    %p84 = scmp.eq.s32.totalorder %s9, 0
    %p85 = por %p83, %p84
    %p86 = scmp.ne.s32.totalorder %s78, %s80
    %p87 = scmp.eq.s32.totalorder %s14, 1
    %p88 = por %p86, %p87
    %p89 = scmp.ne.s32.totalorder %s80, %s81
    %p90 = scmp.eq.s32.totalorder %s14, 0
    %p91 = por %p89, %p90
    %p92 = scmp.ne.s32.totalorder %s80, %s81
    %p93 = scmp.eq.s32.totalorder %s15, 1
    %p94 = por %p92, %p93
    %p96 = scmp.ne.s32.totalorder %s81, %s95
    %p97 = scmp.eq.s32.totalorder %s15, 0
    %p98 = por %p96, %p97
    %s99 = ssub.s32 %s16, %s28
    %p100 = scmp.eq.s32.totalorder %s99, 0
    %s102 = sadd.s32 %s101, 1
    %s103 = scalar_select %p100, %s101, %s102
    %p106 = pneg %p100
    %p107 = scmp.eq.s32.totalorder %s9, 1
    %p108 = por %p106, %p107
    %p109 = scmp.ne.s32.totalorder %s101, %s104
    %p110 = scmp.eq.s32.totalorder %s9, 0
    %p111 = por %p109, %p110
    %p112 = scmp.ne.s32.totalorder %s101, %s104
    %p113 = scmp.eq.s32.totalorder %s14, 1
    %p114 = por %p112, %p113
    %p115 = scmp.ne.s32.totalorder %s104, %s105
    %p116 = scmp.eq.s32.totalorder %s14, 0
    %p117 = por %p115, %p116
    %p118 = scmp.ne.s32.totalorder %s104, %s105
    %p119 = scmp.eq.s32.totalorder %s15, 1
    %p120 = por %p118, %p119
    %p122 = scmp.ne.s32.totalorder %s105, %s121
    %p123 = scmp.eq.s32.totalorder %s15, 0
    %p124 = por %p122, %p123
    %p125 = scmp.le.s32.totalorder 1, %s9
    %p126 = scmp.lt.s32.totalorder %s9, 3
    %p127 = pnand %p125, %p126
    %p128 = pneg %p127
    // Predicated region
    $region9: #{cnn_encoder_forward.2} parent=5 // pred_check
      _
    $region10: #{cnn_encoder_forward.2} parent=5 // pred_check_branch
      %130 = sbr.rel (%p127) target = $region12
    $region11: #{cnn_encoder_forward.2} parent=5 // pred_region
      %s131 = ssub.s32 %s9, 1
      // Predicated region
      $region13: #{cnn_encoder_forward.2} parent=11 // pred_check
        %p132 = pneg %p70
      $region14: #{cnn_encoder_forward.2} parent=11 // pred_check_branch
        %134 = sbr.rel (%p132) target = $region16
      $region15: #{cnn_encoder_forward.2} parent=11 // pred_region
        _
      $region16: #{cnn_encoder_forward.2} parent=11 // pred_fallthru
        _
      // Predicated region
      $region17: #{cnn_encoder_forward.2} parent=11 // pred_check
        %p135 = pneg %p91
      $region18: #{cnn_encoder_forward.2} parent=11 // pred_check_branch
        %137 = sbr.rel (%p135) target = $region20
      $region19: #{cnn_encoder_forward.2} parent=11 // pred_region
        _
      $region20: #{cnn_encoder_forward.2} parent=11 // pred_fallthru
        _
    $region12: #{cnn_encoder_forward.2} parent=5 // pred_fallthru
      _
    %p138 = scmp.lt.s32.totalorder %s9, 2
    // Predicated region
    $region21: #{cnn_encoder_forward.2} parent=5 // pred_check
      %p139 = pneg %p138
    $region22: #{cnn_encoder_forward.2} parent=5 // pred_check_branch
      %141 = sbr.rel (%p139) target = $region24
    $region23: #{cnn_encoder_forward.2} parent=5 // pred_region
      // Predicated region
      $region25: #{cnn_encoder_forward.2} parent=23 // pred_check
        %p142 = pneg %p43
      $region26: #{cnn_encoder_forward.2} parent=23 // pred_check_branch
        %144 = sbr.rel (%p142) target = $region28
      $region27: #{cnn_encoder_forward.2} parent=23 // pred_region
        %p145 = scmp.lt.s32.totalorder %s16, 1
        %s146 = scalar_select %p145, %s16, 1
        %p147 = scmp.lt.s32.totalorder %s17, 0
        %s148 = scalar_select %p147, %s17, 0
        %s149 = smul.addr %s146, 4
        %s150 = sadd.s32 %s148, %s149
        %s151 = smul.addr %s150, 4
        %s152 = scalar_lea.vmem %s0, %s151
      $region28: #{cnn_encoder_forward.2} parent=23 // pred_fallthru
        _
    $region24: #{cnn_encoder_forward.2} parent=5 // pred_fallthru
      _
    %p153 = scmp.le.s32.totalorder 1, %s9
    %p154 = scmp.lt.s32.totalorder %s9, 3
    %p155 = pnand %p153, %p154
    %p156 = pneg %p155
    // Predicated region
    $region29: #{cnn_encoder_forward.2} parent=5 // pred_check
      _
    $region30: #{cnn_encoder_forward.2} parent=5 // pred_check_branch
      %158 = sbr.rel (%p155) target = $region32
    $region31: #{cnn_encoder_forward.2} parent=5 // pred_region
      %s159 = ssub.s32 %s9, 1
      %p160 = scmp.lt.s32.totalorder %s18, 1
      %s161 = scalar_select %p160, %s18, 1
      %p162 = scmp.lt.s32.totalorder %s19, 0
      %s163 = scalar_select %p162, %s19, 0
      %s164 = smul.addr %s161, 4
      %s165 = sadd.s32 %s163, %s164
      %s166 = smul.addr %s165, 4
      %s167 = scalar_lea.vmem %s0, %s166
      %p168 = pneg %p49
      %p169 = pneg %p46
      %p170 = pneg %p70
      %p171 = pneg %p67
      %p172 = pneg %p91
      %p173 = pneg %p88
      %p174 = pneg %p117
      %p175 = pneg %p114
      %p176 = scmp.lt.s32.totalorder %s18, 1
      %s177 = scalar_select %p176, %s18, 1
      %s178 = smul.addr %s177, 6
      %s179 = smul.addr %s178, 8
      %s180 = scalar_lea.vmem %s3, %s179
      %p181 = scmp.lt.s32.totalorder %s18, 1
      %s182 = scalar_select %p181, %s18, 1
      %p183 = scmp.lt.s32.totalorder %s19, 0
      %s184 = scalar_select %p183, %s19, 0
      %s185 = smul.addr %s182, 4
      %s186 = sadd.s32 %s184, %s185
      %s187 = smul.addr %s186, 4
      %s188 = scalar_lea.vmem %s0, %s187
      %p189 = scmp.lt.s32.totalorder %s18, 1
      %s190 = scalar_select %p189, %s18, 1
      %s191 = smul.addr %s190, 6
      %s192 = smul.addr %s191, 8
      %s193 = scalar_lea.vmem %s3, %s192
      %p195 = scmp.eq.s32.totalorder %s19, 0
      // Predicated region
      $region33: #{cnn_encoder_forward.2} parent=31 // pred_check
        %p196 = pneg %p195
      $region34: #{cnn_encoder_forward.2} parent=31 // pred_check_branch
        %198 = sbr.rel (%p196) target = $region36
      $region35: #{cnn_encoder_forward.2} parent=31 // pred_region
        %vm199 = vcmask 7168
        %200 = vst.msk [vmem:[%s193] sm:$0xff] %vm199, 0.0
        %201 = vst.msk [vmem:[%s193 + $0x8] sm:$0xff] %vm199, 0.0
        %202 = vst.msk [vmem:[%s193 + $0x10] sm:$0xff] %vm199, 0.0
        %203 = vst.msk [vmem:[%s193 + $0x18] sm:$0xff] %vm199, 0.0
        %204 = vst.msk [vmem:[%s193 + $0x20] sm:$0xff] %vm199, 0.0
        %205 = vst.msk [vmem:[%s193 + $0x28] sm:$0xff] %vm199, 0.0
      $region36: #{cnn_encoder_forward.2} parent=31 // pred_fallthru
        _
      %v206 = vld [vmem:[%s188] sm:$0xf]
      %v207 = vld [vmem:[%s188 + $0x4] sm:$0xf]
      %v208 = vld [vmem:[%s188 + $0x8] sm:$0xf]
      %v209 = vld [vmem:[%s188 + $0xc] sm:$0x3]
      %v210 = vld [vmem:[%s1] sm:$0xf]
      %v211 = vld [vmem:[%s1 + $0x4] sm:$0xf]
      %v212 = vld [vmem:[%s1 + $0x8] sm:$0xf]
      %v213 = vld [vmem:[%s1 + $0xc] sm:$0xf]
      %v214 = vld [vmem:[%s1 + $0x10] sm:$0xf]
      %v215 = vld [vmem:[%s1 + $0x14] sm:$0xf]
      %v216 = vld [vmem:[%s2] sm:$0xff]
      %v217 = vld [vmem:[%s2 + $0x8] sm:$0xff]
      %v218 = vld [vmem:[%s2 + $0x10] sm:$0xff]
      %v219 = vld [vmem:[%s2 + $0x18] sm:$0xff]
      %v220 = vld [vmem:[%s2 + $0x20] sm:$0xff]
      %v221 = vld [vmem:[%s2 + $0x28] sm:$0xff]
      %223 = vset.pattern.permute.xlu0 0
      %224 = vperm.xlu0 %223, %v216
      %v225 = vpop.permute.xlu0 %224
      %228 = vset.pattern.permute.xlu0 0
      %229 = vperm.xlu0 %228, %v217
      %v230 = vpop.permute.xlu0 %229
      %233 = vset.pattern.permute.xlu0 0
      %234 = vperm.xlu0 %233, %v218
      %v235 = vpop.permute.xlu0 %234
      %238 = vset.pattern.permute.xlu0 0
      %239 = vperm.xlu0 %238, %v219
      %v240 = vpop.permute.xlu0 %239
      %243 = vset.pattern.permute.xlu0 0
      %244 = vperm.xlu0 %243, %v220
      %v245 = vpop.permute.xlu0 %244
      %248 = vset.pattern.permute.xlu0 0
      %249 = vperm.xlu0 %248, %v221
      %v250 = vpop.permute.xlu0 %249
      %v258 = vunpack.c.l.b16 %v210
      %v259 = vunpack.c.l.b16 %v211
      %v260 = vunpack.c.l.b16 %v212
      %v261 = vunpack.c.l.b16 %v213
      %v262 = vunpack.c.l.b16 %v214
      %v263 = vunpack.c.l.b16 %v215
      %v264 = vpack.c.b16 %v259, %v258
      %v265 = vpack.c.b16 %v261, %v260
      %v266 = vpack.c.b16 %v263, %v262
      %v271 = vunpack.c.l.b16 %v206
      %v272 = vunpack.c.l.b16 %v207
      %v273 = vunpack.c.l.b16 %v208
      %v274 = vunpack.c.l.b16 %v209
      %v275 = vpack.c.b16 %v272, %v271
      %v276 = vpack.c.b16 %v274, %v273
      %vm278 = vcmask 220160
      %v280 = vsel %vm278, %v264, 0
      %v283 = vsel %vm278, %v265, 0
      %v286 = vsel %vm278, %v266, 0
      %vm288 = vcmask 1044480
      %vm289 = vcmask 1045504
      %v290 = vsel %vm288, 4294967295, 65535
      %v291 = vsel %vm289, %v290, 0
      %v293 = vand.u32 %v276, %v291
      %295 = vmatprep.subr.bf16.mxu0 0
      %296 = vmatpush1.bf16.msra.mxu0 0
      %297 = vmatprep.subr.bf16.mxu0 0
      %298 = vmatpush1.bf16.msra.mxu0 0
      %299 = vmatprep.subr.bf16.mxu0 0
      %300 = vmatpush1.bf16.msra.mxu0 0
      %301 = vmatprep.subr.bf16.mxu0 0
      %302 = vmatpush1.bf16.msra.mxu0 0
      %303 = vmatprep.subr.bf16.mxu0 0
      %304 = vmatpush1.bf16.msra.mxu0 0
      %305 = vmatprep.subr.bf16.mxu0 0
      %306 = vmatpush1.bf16.msra.mxu0 0
      %307 = vmatprep.subr.bf16.mxu0 0
      %308 = vmatpush1.bf16.msra.mxu0 %v293
      %309 = vmatprep.subr.bf16.mxu0 0
      %310 = vmatpush1.bf16.msra.mxu0 %v275
      %311 = vmatprep.subr.bf16.mxu0 0
      %312 = vmatpush2.bf16.msra.mxu0 0
      %313 = vmatprep.subr.bf16.mxu0 0
      %314 = vmatpush2.bf16.msra.mxu0 0
      %315 = vmatprep.subr.bf16.mxu0 0
      %316 = vmatpush2.bf16.msra.mxu0 0
      %317 = vmatprep.subr.bf16.mxu0 0
      %318 = vmatpush2.bf16.msra.mxu0 0
      %319 = vmatprep.subr.bf16.mxu0 0
      %320 = vmatpush2.bf16.msra.mxu0 0
      %321 = vmatprep.subr.bf16.mxu0 0
      %322 = vmatpush2.bf16.msra.mxu0 0
      %323 = vmatprep.subr.bf16.mxu0 0
      %324 = vmatpush2.bf16.msra.mxu0 0
      %325 = vmatprep.subr.bf16.mxu0 0
      %326 = vmatpush2.bf16.msra.mxu0 0
      %327 = vmatprep.mubr.bf16.mxu0 0
      %328 = vmatmul.mubr.bf16.gmra.mxu0 %v280
      %v329 = vpop.f32.mrf.mxu0
      %v330 = vadd.f32 %v225, %v329
      %v331 = vpop.f32.mrf.mxu0
      %v332 = vpop.f32.mrf.mxu0
      %v333 = vadd.f32 %v230, %v332
      %v334 = vpop.f32.mrf.mxu0
      %335 = vmatprep.mubr.bf16.mxu0 0
      %336 = vmatmul.mubr.bf16.gmra.mxu0 %v283
      %v337 = vpop.f32.mrf.mxu0
      %v338 = vadd.f32 %v235, %v337
      %v339 = vpop.f32.mrf.mxu0
      %v340 = vpop.f32.mrf.mxu0
      %v341 = vadd.f32 %v240, %v340
      %v342 = vpop.f32.mrf.mxu0
      %343 = vmatprep.mubr.bf16.mxu0 0
      %344 = vmatmul.mubr.bf16.gmra.mxu0 %v286
      %v345 = vpop.f32.mrf.mxu0
      %v346 = vadd.f32 %v245, %v345
      %v347 = vpop.f32.mrf.mxu0
      %v348 = vpop.f32.mrf.mxu0
      %v349 = vadd.f32 %v250, %v348
      %v350 = vpop.f32.mrf.mxu0
      %351 = vdwg.mxu0
      %v352 = vxor.u32 %v330, 2147483648
      %v353 = vxor.u32 %v333, 2147483648
      %v354 = vxor.u32 %v338, 2147483648
      %v355 = vxor.u32 %v341, 2147483648
      %v356 = vxor.u32 %v346, 2147483648
      %v357 = vxor.u32 %v349, 2147483648
      %v358 = vmul.f32 %v352, 1.442695
      %v359 = vpow.pop %v358
      %v360 = vmul.f32 %v353, 1.442695
      %v361 = vpow.pop %v360
      %v362 = vmul.f32 %v354, 1.442695
      %v363 = vpow.pop %v362
      %v364 = vmul.f32 %v355, 1.442695
      %v365 = vpow.pop %v364
      %v366 = vmul.f32 %v356, 1.442695
      %v367 = vpow.pop %v366
      %v368 = vmul.f32 %v357, 1.442695
      %v369 = vpow.pop %v368
      %v370 = vadd.f32 %v359, 1.0
      %v371 = vadd.f32 %v361, 1.0
      %v372 = vadd.f32 %v363, 1.0
      %v373 = vadd.f32 %v365, 1.0
      %v374 = vadd.f32 %v367, 1.0
      %v375 = vadd.f32 %v369, 1.0
      %v376 = vrcp.pop %v370
      %v377 = vmul.f32 1.0, %v376
      %v378 = vrcp.pop %v371
      %v379 = vmul.f32 1.0, %v378
      %v380 = vrcp.pop %v372
      %v381 = vmul.f32 1.0, %v380
      %v382 = vrcp.pop %v373
      %v383 = vmul.f32 1.0, %v382
      %v384 = vrcp.pop %v374
      %v385 = vmul.f32 1.0, %v384
      %v386 = vrcp.pop %v375
      %v387 = vmul.f32 1.0, %v386
      %v388 = vmul.f32 %v330, %v377
      %v389 = vmul.f32 %v333, %v379
      %v390 = vmul.f32 %v338, %v381
      %v391 = vmul.f32 %v341, %v383
      %v392 = vmul.f32 %v346, %v385
      %v393 = vmul.f32 %v349, %v387
      %p394 = scmp.ne.s32.totalorder %s19, 0
      // Predicated region
      $region37: #{cnn_encoder_forward.2} parent=31 // pred_check
        %p395 = pneg %p394
      $region38: #{cnn_encoder_forward.2} parent=31 // pred_check_branch
        %397 = sbr.rel (%p395) target = $region40
      $region39: #{cnn_encoder_forward.2} parent=31 // pred_region
        %v398 = vld [vmem:[%s193] sm:$0xff]
        %v399 = vld [vmem:[%s193 + $0x8] sm:$0xff]
        %v400 = vld [vmem:[%s193 + $0x10] sm:$0xff]
        %v401 = vld [vmem:[%s193 + $0x18] sm:$0xff]
        %v402 = vld [vmem:[%s193 + $0x20] sm:$0xff]
        %v403 = vld [vmem:[%s193 + $0x28] sm:$0xff]
        %404 = vadd.xlane.f32.xlu0 %v388
        %v405 = vpop.xlane.xlu0 %404
        %406 = vadd.xlane.f32.xlu0 %v389
        %v407 = vpop.xlane.xlu0 %406
        %408 = vadd.xlane.f32.xlu0 %v390
        %v409 = vpop.xlane.xlu0 %408
        %410 = vadd.xlane.f32.xlu0 %v391
        %v411 = vpop.xlane.xlu0 %410
        %412 = vadd.xlane.f32.xlu0 %v392
        %v413 = vpop.xlane.xlu0 %412
        %414 = vadd.xlane.f32.xlu0 %v393
        %v415 = vpop.xlane.xlu0 %414
        %v416 = vadd.f32 %v398, %v405
        %v417 = vadd.f32 %v399, %v407
        %v418 = vadd.f32 %v400, %v409
        %v419 = vadd.f32 %v401, %v411
        %v420 = vadd.f32 %v402, %v413
        %v421 = vadd.f32 %v403, %v415
        %vm422 = vcmask 7168
        %423 = vst.msk [vmem:[%s193] sm:$0xff] %vm422, %v416
        %424 = vst.msk [vmem:[%s193 + $0x8] sm:$0xff] %vm422, %v417
        %425 = vst.msk [vmem:[%s193 + $0x10] sm:$0xff] %vm422, %v418
        %426 = vst.msk [vmem:[%s193 + $0x18] sm:$0xff] %vm422, %v419
        %427 = vst.msk [vmem:[%s193 + $0x20] sm:$0xff] %vm422, %v420
        %428 = vst.msk [vmem:[%s193 + $0x28] sm:$0xff] %vm422, %v421
      $region40: #{cnn_encoder_forward.2} parent=31 // pred_fallthru
        _
      // Predicated region
      $region41: #{cnn_encoder_forward.2} parent=31 // pred_check
        %p429 = pneg %p195
      $region42: #{cnn_encoder_forward.2} parent=31 // pred_check_branch
        %431 = sbr.rel (%p429) target = $region44
      $region43: #{cnn_encoder_forward.2} parent=31 // pred_region
        %s432 = smul.u32 %s19, 128
        %v433 = vlaneseq
        %v434 = vand.u32 %v433, 127
        %v435 = vstv %s432
        %v436 = vadd.s32 %v435, %v434
        %vm437 = vcmp.lt.s32.totalorder %v436, 64
        %v438 = vsel %vm437, 1, 0
        %vm439 = vcmp.eq.s32.totalorder %v438, 1
        %v440 = vsel %vm439, %v388, 0.0
        %v441 = vsel %vm439, %v389, 0.0
        %v442 = vsel %vm439, %v390, 0.0
        %v443 = vsel %vm439, %v391, 0.0
        %v444 = vsel %vm439, %v392, 0.0
        %v445 = vsel %vm439, %v393, 0.0
        %v446 = vld [vmem:[%s193] sm:$0xff]
        %v447 = vld [vmem:[%s193 + $0x8] sm:$0xff]
        %v448 = vld [vmem:[%s193 + $0x10] sm:$0xff]
        %v449 = vld [vmem:[%s193 + $0x18] sm:$0xff]
        %v450 = vld [vmem:[%s193 + $0x20] sm:$0xff]
        %v451 = vld [vmem:[%s193 + $0x28] sm:$0xff]
        %452 = vadd.xlane.f32.xlu0 %v440
        %v453 = vpop.xlane.xlu0 %452
        %454 = vadd.xlane.f32.xlu0 %v441
        %v455 = vpop.xlane.xlu0 %454
        %456 = vadd.xlane.f32.xlu0 %v442
        %v457 = vpop.xlane.xlu0 %456
        %458 = vadd.xlane.f32.xlu0 %v443
        %v459 = vpop.xlane.xlu0 %458
        %460 = vadd.xlane.f32.xlu0 %v444
        %v461 = vpop.xlane.xlu0 %460
        %462 = vadd.xlane.f32.xlu0 %v445
        %v463 = vpop.xlane.xlu0 %462
        %v464 = vadd.f32 %v446, %v453
        %v465 = vadd.f32 %v447, %v455
        %v466 = vadd.f32 %v448, %v457
        %v467 = vadd.f32 %v449, %v459
        %v468 = vadd.f32 %v450, %v461
        %v469 = vadd.f32 %v451, %v463
        %vm470 = vcmask 7168
        %471 = vst.msk [vmem:[%s193] sm:$0xff] %vm470, %v464
        %472 = vst.msk [vmem:[%s193 + $0x8] sm:$0xff] %vm470, %v465
        %473 = vst.msk [vmem:[%s193 + $0x10] sm:$0xff] %vm470, %v466
        %474 = vst.msk [vmem:[%s193 + $0x18] sm:$0xff] %vm470, %v467
        %475 = vst.msk [vmem:[%s193 + $0x20] sm:$0xff] %vm470, %v468
        %476 = vst.msk [vmem:[%s193 + $0x28] sm:$0xff] %vm470, %v469
        %v477 = vld [vmem:[%s193] sm:$0xff]
        %v478 = vld [vmem:[%s193 + $0x8] sm:$0xff]
        %v479 = vld [vmem:[%s193 + $0x10] sm:$0xff]
        %v480 = vld [vmem:[%s193 + $0x18] sm:$0xff]
        %v481 = vld [vmem:[%s193 + $0x20] sm:$0xff]
        %v482 = vld [vmem:[%s193 + $0x28] sm:$0xff]
        %v483 = vmul.f32 %v477, 0.015625
        %v484 = vmul.f32 %v478, 0.015625
        %v485 = vmul.f32 %v479, 0.015625
        %v486 = vmul.f32 %v480, 0.015625
        %v487 = vmul.f32 %v481, 0.015625
        %v488 = vmul.f32 %v482, 0.015625
        %489 = vst.msk [vmem:[%s193] sm:$0xff] %vm470, %v483
        %490 = vst.msk [vmem:[%s193 + $0x8] sm:$0xff] %vm470, %v484
        %491 = vst.msk [vmem:[%s193 + $0x10] sm:$0xff] %vm470, %v485
        %492 = vst.msk [vmem:[%s193 + $0x18] sm:$0xff] %vm470, %v486
        %493 = vst.msk [vmem:[%s193 + $0x20] sm:$0xff] %vm470, %v487
        %494 = vst.msk [vmem:[%s193 + $0x28] sm:$0xff] %vm470, %v488
      $region44: #{cnn_encoder_forward.2} parent=31 // pred_fallthru
        _
      %p495 = scmp.lt.s32.totalorder %s18, 1
      %s496 = scalar_select %p495, %s18, 1
      %s497 = smul.addr %s496, 6
      %s498 = smul.addr %s497, 8
      %s499 = scalar_lea.vmem %s3, %s498
      // Predicated region
      $region45: #{cnn_encoder_forward.2} parent=31 // pred_check
        %p500 = pneg %p114
      $region46: #{cnn_encoder_forward.2} parent=31 // pred_check_branch
        %502 = sbr.rel (%p500) target = $region48
      $region47: #{cnn_encoder_forward.2} parent=31 // pred_region
        _
      $region48: #{cnn_encoder_forward.2} parent=31 // pred_fallthru
        _
    $region32: #{cnn_encoder_forward.2} parent=5 // pred_fallthru
      _
    %p503 = scmp.le.s32.totalorder 2, %s9
    // Predicated region
    $region49: #{cnn_encoder_forward.2} parent=5 // pred_check
      %p504 = pneg %p503
    $region50: #{cnn_encoder_forward.2} parent=5 // pred_check_branch
      %506 = sbr.rel (%p504) target = $region52
    $region51: #{cnn_encoder_forward.2} parent=5 // pred_region
      %s507 = ssub.s32 %s9, 2
      // Predicated region
      $region53: #{cnn_encoder_forward.2} parent=51 // pred_check
        %p508 = pneg %p120
      $region54: #{cnn_encoder_forward.2} parent=51 // pred_check_branch
        %510 = sbr.rel (%p508) target = $region56
      $region55: #{cnn_encoder_forward.2} parent=51 // pred_region
        %p511 = scmp.lt.s32.totalorder %s20, 1
        %s512 = scalar_select %p511, %s20, 1
        %s513 = smul.addr %s512, 6
        %s514 = smul.addr %s513, 8
        %s515 = scalar_lea.vmem %s3, %s514
      $region56: #{cnn_encoder_forward.2} parent=51 // pred_fallthru
        _
    $region52: #{cnn_encoder_forward.2} parent=5 // pred_fallthru
      _
  $region6: #{cnn_encoder_forward.2} parent=0 // loop_footer
    %s13 = sadd.s32 1, %s9
  $region7: #{cnn_encoder_forward.2} parent=0 // loop_footer_branch
    %8 = sbr.rel target = $region3
  $region8: #{cnn_encoder_forward.2} parent=0 // loop_exit
    _

// kernel: cnn_encoder_forward.3
$region0: #{cnn_encoder_forward.3}
  #allocation0 [shape = 'u32[]', space=smem, size = 0x4, offset = 0x4, fixed_abs, tag = 'smem constant byte address 0x4 - core index']
  #allocation1 [shape = 'u32[144,128]{1,0:T(1,128)}', space=vmem, size = 0x12000, scoped, tag = 'internal scratch']
  %s0 = inlined_call_operand.vmem [shape: f32[2,48], index: 0, kind: input, shape index: {}]
  %s1 = inlined_call_operand.hbm [shape: bf16[48,2048], index: 1, kind: input, shape index: {}]
  %s2 = inlined_call_operand.hbm [shape: f32[1,2048], index: 2, kind: input, shape index: {}]
  %s3 = inlined_call_operand.hbm [shape: bf16[2048,1024], index: 3, kind: input, shape index: {}]
  %s4 = inlined_call_operand.hbm [shape: f32[1,1024], index: 4, kind: input, shape index: {}]
  %s5 = inlined_call_operand.hbm [shape: f32[2,1024], index: 5, kind: output, shape index: {}]
  %s6 = sld [smem:[#allocation0]]
  $region73: #{cnn_encoder_forward.3} parent=0
    _
  %s8 = ssub.s32 1, %s6
  %s9 = scalar_select 0, %s8, %s6
  $region1: #{cnn_encoder_forward.3} parent=0
    #allocation2 [shape = 'u8[49152]{0}', space=vmem, size = 0xc000, scoped, tag = 'input window, operand 1']
    #allocation3 [shape = 's32[2]{0}', space=sflag, size = 0x8, scoped, tag = 'scoped memory for cnn_encoder_forward.3']
    #allocation4 [shape = 's32[2]{0}', space=sflag, size = 0x8, scoped, tag = 'scoped memory for cnn_encoder_forward.3']
    #allocation5 [shape = 'u8[2048]{0}', space=vmem, size = 0x800, scoped, tag = 'input window, operand 2']
    #allocation6 [shape = 's32[2]{0}', space=sflag, size = 0x8, scoped, tag = 'scoped memory for cnn_encoder_forward.3']
    #allocation7 [shape = 'u8[1048576]{0}', space=vmem, size = 0x100000, scoped, tag = 'input window, operand 3']
    #allocation8 [shape = 'u8[4096]{0}', space=vmem, size = 0x1000, scoped, tag = 'input window, operand 4, single buffered']
    #allocation9 [shape = 's32[1]{0}', space=sflag, size = 0x4, scoped, tag = 'scoped memory for cnn_encoder_forward.3']
    #allocation10 [shape = 'u8[8192]{0}', space=vmem, size = 0x2000, scoped, tag = 'output window, operand 0, single buffered']
    %10 = vsyncpa [#allocation3], 0
    %s11 = scalar_lea.sflag [#allocation3], 1
    %12 = vsyncpa %s11, 0
    %13 = vsyncpa [#allocation6], 0
    %s14 = scalar_lea.sflag [#allocation6], 1
    %15 = vsyncpa %s14, 0
    %16 = vsyncpa [#allocation9], 0
    %17 = vsyncpa [#allocation4], 0
    loop: start=0, step=1, limit=10
    $region2: #{cnn_encoder_forward.3} parent=1 // loop_pre_header
      _
    $region3: #{cnn_encoder_forward.3} parent=1 // loop_header
      %s19 = sphi 0, %s23
      %p20 = scmp.ge.s32.totalorder %s19, 10
      %s27 = sphi 0, %s27
      %s29 = sphi 0, %s27
      %s30 = sphi 0, %s29
      %s44 = sphi 0, %s30
      %s50 = sphi 0, %s52
      %s53 = sphi 0, %s50
      %s54 = sphi 0, %s53
      %s70 = sphi 0, %s54
      %s76 = sphi 0, %s78
      %s79 = sphi 0, %s76
      %s80 = sphi 0, %s79
      %s96 = sphi 0, %s80
      %s102 = sphi 0, %s104
      %s105 = sphi 0, %s102
      %s106 = sphi 0, %s105
      %s122 = sphi 0, %s106
      %s126 = sphi 0, %s126
      %s128 = sphi 0, %s126
      %s129 = sphi 0, %s128
      %s143 = sphi 0, %s129
      %s147 = sphi 0, %s147
      %s149 = sphi 0, %s147
      %s150 = sphi 0, %s149
      %s164 = sphi 0, %s150
    $region4: #{cnn_encoder_forward.3} parent=1 // loop_header_branch
      %22 = sbr.rel (%p20) target = $region8
    $region5: #{cnn_encoder_forward.3} parent=1 // loop_body
      %s24 = ssub.s32 %s19, 1
      %s25 = ssub.s32 %s19, 2
      %s26 = sadd.s32 %s19, 1
      %s28 = sadd.s32 %s27, 1
      %p31 = scmp.eq.s32.totalorder %s19, 7
      %p32 = scmp.ne.s32.totalorder %s27, %s29
      %p33 = scmp.eq.s32.totalorder %s19, 0
      %p34 = por %p32, %p33
      %p35 = scmp.ne.s32.totalorder %s27, %s29
      %p36 = scmp.eq.s32.totalorder %s24, 7
      %p37 = por %p35, %p36
      %p38 = scmp.ne.s32.totalorder %s29, %s30
      %p39 = scmp.eq.s32.totalorder %s24, 0
      %p40 = por %p38, %p39
      %p41 = scmp.ne.s32.totalorder %s29, %s30
      %p42 = scmp.eq.s32.totalorder %s25, 7
      %p43 = por %p41, %p42
      %p45 = scmp.ne.s32.totalorder %s30, %s44
      %p46 = scmp.eq.s32.totalorder %s25, 0
      %p47 = por %p45, %p46
      %s48 = ssub.s32 %s19, %s26
      %p49 = scmp.eq.s32.totalorder %s48, 0
      %s51 = sadd.s32 %s50, 1
      %s52 = scalar_select %p49, %s50, %s51
      %p55 = pneg %p49
      %p56 = scmp.eq.s32.totalorder %s19, 7
      %p57 = por %p55, %p56
      %p58 = scmp.ne.s32.totalorder %s50, %s53
      %p59 = scmp.eq.s32.totalorder %s19, 0
      %p60 = por %p58, %p59
      %p61 = scmp.ne.s32.totalorder %s50, %s53
      %p62 = scmp.eq.s32.totalorder %s24, 7
      %p63 = por %p61, %p62
      %p64 = scmp.ne.s32.totalorder %s53, %s54
      %p65 = scmp.eq.s32.totalorder %s24, 0
      %p66 = por %p64, %p65
      %p67 = scmp.ne.s32.totalorder %s53, %s54
      %p68 = scmp.eq.s32.totalorder %s25, 7
      %p69 = por %p67, %p68
      %p71 = scmp.ne.s32.totalorder %s54, %s70
      %p72 = scmp.eq.s32.totalorder %s25, 0
      %p73 = por %p71, %p72
      %s74 = ssub.s32 %s19, %s26
      %p75 = scmp.eq.s32.totalorder %s74, 0
      %s77 = sadd.s32 %s76, 1
      %s78 = scalar_select %p75, %s76, %s77
      %p81 = pneg %p75
      %p82 = scmp.eq.s32.totalorder %s19, 7
      %p83 = por %p81, %p82
      %p84 = scmp.ne.s32.totalorder %s76, %s79
      %p85 = scmp.eq.s32.totalorder %s19, 0
      %p86 = por %p84, %p85
      %p87 = scmp.ne.s32.totalorder %s76, %s79
      %p88 = scmp.eq.s32.totalorder %s24, 7
      %p89 = por %p87, %p88
      %p90 = scmp.ne.s32.totalorder %s79, %s80
      %p91 = scmp.eq.s32.totalorder %s24, 0
      %p92 = por %p90, %p91
      %p93 = scmp.ne.s32.totalorder %s79, %s80
      %p94 = scmp.eq.s32.totalorder %s25, 7
      %p95 = por %p93, %p94
      %p97 = scmp.ne.s32.totalorder %s80, %s96
      %p98 = scmp.eq.s32.totalorder %s25, 0
      %p99 = por %p97, %p98
      %s100 = ssub.s32 %s19, %s26
      %p101 = scmp.eq.s32.totalorder %s100, 0
      %s103 = sadd.s32 %s102, 1
      %s104 = scalar_select %p101, %s102, %s103
      %p107 = pneg %p101
      %p108 = scmp.eq.s32.totalorder %s19, 7
      %p109 = por %p107, %p108
      %p110 = scmp.ne.s32.totalorder %s102, %s105
      %p111 = scmp.eq.s32.totalorder %s19, 0
      %p112 = por %p110, %p111
      %p113 = scmp.ne.s32.totalorder %s102, %s105
      %p114 = scmp.eq.s32.totalorder %s24, 7
      %p115 = por %p113, %p114
      %p116 = scmp.ne.s32.totalorder %s105, %s106
      %p117 = scmp.eq.s32.totalorder %s24, 0
      %p118 = por %p116, %p117
      %p119 = scmp.ne.s32.totalorder %s105, %s106
      %p120 = scmp.eq.s32.totalorder %s25, 7
      %p121 = por %p119, %p120
      %p123 = scmp.ne.s32.totalorder %s106, %s122
      %p124 = scmp.eq.s32.totalorder %s25, 0
      %p125 = por %p123, %p124
      %s127 = sadd.s32 %s126, 1
      %p130 = scmp.eq.s32.totalorder %s19, 7
      %p131 = scmp.ne.s32.totalorder %s126, %s128
      %p132 = scmp.eq.s32.totalorder %s19, 0
      %p133 = por %p131, %p132
      %p134 = scmp.ne.s32.totalorder %s126, %s128
      %p135 = scmp.eq.s32.totalorder %s24, 7
      %p136 = por %p134, %p135
      %p137 = scmp.ne.s32.totalorder %s128, %s129
      %p138 = scmp.eq.s32.totalorder %s24, 0
      %p139 = por %p137, %p138
      %p140 = scmp.ne.s32.totalorder %s128, %s129
      %p141 = scmp.eq.s32.totalorder %s25, 7
      %p142 = por %p140, %p141
      %p144 = scmp.ne.s32.totalorder %s129, %s143
      %p145 = scmp.eq.s32.totalorder %s25, 0
      %p146 = por %p144, %p145
      %s148 = sadd.s32 %s147, 1
      %p151 = scmp.eq.s32.totalorder %s19, 7
      %p152 = scmp.ne.s32.totalorder %s147, %s149
      %p153 = scmp.eq.s32.totalorder %s19, 0
      %p154 = por %p152, %p153
      %p155 = scmp.ne.s32.totalorder %s147, %s149
      %p156 = scmp.eq.s32.totalorder %s24, 7
      %p157 = por %p155, %p156
      %p158 = scmp.ne.s32.totalorder %s149, %s150
      %p159 = scmp.eq.s32.totalorder %s24, 0
      %p160 = por %p158, %p159
      %p161 = scmp.ne.s32.totalorder %s149, %s150
      %p162 = scmp.eq.s32.totalorder %s25, 7
      %p163 = por %p161, %p162
      %p165 = scmp.ne.s32.totalorder %s150, %s164
      %p166 = scmp.eq.s32.totalorder %s25, 0
      %p167 = por %p165, %p166
      %p168 = scmp.le.s32.totalorder 1, %s19
      %p169 = scmp.lt.s32.totalorder %s19, 9
      %p170 = pnand %p168, %p169
      %p171 = pneg %p170
      // Predicated region
      $region9: #{cnn_encoder_forward.3} parent=5 // pred_check
        _
      $region10: #{cnn_encoder_forward.3} parent=5 // pred_check_branch
        %173 = sbr.rel (%p170) target = $region12
      $region11: #{cnn_encoder_forward.3} parent=5 // pred_region
        %s174 = ssub.s32 %s19, 1
        // Predicated region
        $region13: #{cnn_encoder_forward.3} parent=11 // pred_check
          %p175 = pneg %p40
        $region14: #{cnn_encoder_forward.3} parent=11 // pred_check_branch
          %177 = sbr.rel (%p175) target = $region16
        $region15: #{cnn_encoder_forward.3} parent=11 // pred_region
          _
        $region16: #{cnn_encoder_forward.3} parent=11 // pred_fallthru
          _
        // Predicated region
        $region17: #{cnn_encoder_forward.3} parent=11 // pred_check
          %p178 = pneg %p139
        $region18: #{cnn_encoder_forward.3} parent=11 // pred_check_branch
          %180 = sbr.rel (%p178) target = $region20
        $region19: #{cnn_encoder_forward.3} parent=11 // pred_region
          %s182 = ssub.s32 128, 128
          %183 = vsyncadd [#allocation9], %s182
          %s185 = sshll.u32 [#allocation8], 4
          %s186 = int_to_ptr.vmem [resolvable:$true] %s185
          %188 = dma.hbm_to_vmem [thread:$0]  %s4, 128, %s186, [#allocation9]
        $region20: #{cnn_encoder_forward.3} parent=11 // pred_fallthru
          _
      $region12: #{cnn_encoder_forward.3} parent=5 // pred_fallthru
        _
      %p189 = scmp.lt.s32.totalorder %s19, 8
      // Predicated region
      $region21: #{cnn_encoder_forward.3} parent=5 // pred_check
        %p190 = pneg %p189
      $region22: #{cnn_encoder_forward.3} parent=5 // pred_check_branch
        %192 = sbr.rel (%p190) target = $region24
      $region23: #{cnn_encoder_forward.3} parent=5 // pred_region
        // Predicated region
        $region25: #{cnn_encoder_forward.3} parent=23 // pred_check
          %p193 = pneg %p60
        $region26: #{cnn_encoder_forward.3} parent=23 // pred_check_branch
          %195 = sbr.rel (%p193) target = $region28
        $region27: #{cnn_encoder_forward.3} parent=23 // pred_region
          %s196 = sand.u32 %s50, 1
          %s197 = scalar_lea.sflag [#allocation3], %s196
          %s198 = sand.u32 %s50, 1
          %s199 = smul.addr %s198, 48
          %s200 = scalar_lea.vmem [#allocation2], %s199
          %s201 = smul.u32 2, %s19
          %s203 = ssub.s32 768, 768
          %204 = vsyncadd %s197, %s203
          %s205 = smul.addr %s201, 64
          %s206 = scalar_lea.hbm %s1, %s205
          %s207 = sshll.u32 %s200, 4
          %s208 = int_to_ptr.vmem [resolvable:$true] %s207
          %213 = dma.hbm_to_vmem [thread:$0]  %s206, 768, %s208, %s197, 1024, 128, 8
        $region28: #{cnn_encoder_forward.3} parent=23 // pred_fallthru
          _
        // Predicated region
        $region29: #{cnn_encoder_forward.3} parent=23 // pred_check
          %p214 = pneg %p86
        $region30: #{cnn_encoder_forward.3} parent=23 // pred_check_branch
          %216 = sbr.rel (%p214) target = $region32
        $region31: #{cnn_encoder_forward.3} parent=23 // pred_region
          %s217 = sand.u32 %s19, 1
          %s218 = scalar_lea.sflag [#allocation6], %s217
          %s219 = sand.u32 %s76, 1
          %s220 = smul.addr %s219, 2
          %s221 = scalar_lea.vmem [#allocation5], %s220
          %s222 = smul.u32 2, %s19
          %s224 = ssub.s32 32, 32
          %225 = vsyncadd %s218, %s224
          %s226 = smul.addr %s222, 16
          %s227 = scalar_lea.hbm %s2, %s226
          %s229 = sshll.u32 %s221, 4
          %s230 = int_to_ptr.vmem [resolvable:$true] %s229
          %232 = dma.hbm_to_vmem [thread:$0]  %s227, 32, %s230, %s218
        $region32: #{cnn_encoder_forward.3} parent=23 // pred_fallthru
          _
        // Predicated region
        $region33: #{cnn_encoder_forward.3} parent=23 // pred_check
          %p233 = pneg %p112
        $region34: #{cnn_encoder_forward.3} parent=23 // pred_check_branch
          %235 = sbr.rel (%p233) target = $region36
        $region35: #{cnn_encoder_forward.3} parent=23 // pred_region
          %s236 = sand.u32 %s19, 1
          %s237 = scalar_lea.sflag [#allocation6], %s236
          %s238 = sand.u32 %s102, 1
          %s239 = smul.addr %s238, 1024
          %s240 = scalar_lea.vmem [#allocation7], %s239
          %s241 = smul.u32 32, %s19
          %s243 = ssub.s32 16384, 16384
          %244 = vsyncadd %s237, %s243
          %s245 = smul.addr %s241, 8
          %s246 = smul.addr %s245, 64
          %s247 = scalar_lea.hbm %s3, %s246
          %s248 = sshll.u32 %s240, 4
          %s249 = int_to_ptr.vmem [resolvable:$true] %s248
          %254 = dma.hbm_to_vmem [thread:$0]  %s247, 16384, %s249, %s237, 512, 512, 32
        $region36: #{cnn_encoder_forward.3} parent=23 // pred_fallthru
          _
      $region24: #{cnn_encoder_forward.3} parent=5 // pred_fallthru
        _
      %p255 = scmp.le.s32.totalorder 1, %s19
      %p256 = scmp.lt.s32.totalorder %s19, 9
      %p257 = pnand %p255, %p256
      %p258 = pneg %p257
      // Predicated region
      $region37: #{cnn_encoder_forward.3} parent=5 // pred_check
        _
      $region38: #{cnn_encoder_forward.3} parent=5 // pred_check_branch
        %260 = sbr.rel (%p257) target = $region40
      $region39: #{cnn_encoder_forward.3} parent=5 // pred_region
        %s261 = ssub.s32 %s19, 1
        %s262 = sand.u32 %s53, 1
        %s263 = scalar_lea.sflag [#allocation3], %s262
        %s264 = sand.u32 %s53, 1
        %s265 = smul.addr %s264, 48
        %s266 = scalar_lea.vmem [#allocation2], %s265
        // Predicated region
        $region41: #{cnn_encoder_forward.3} parent=39 // pred_check
          %p267 = pneg %p66
        $region42: #{cnn_encoder_forward.3} parent=39 // pred_check_branch
          %269 = sbr.rel (%p267) target = $region44
        $region43: #{cnn_encoder_forward.3} parent=39 // pred_region
          %270 = dma.done %s263, 768
        $region44: #{cnn_encoder_forward.3} parent=39 // pred_fallthru
          _
        %s271 = sand.u32 %s24, 1
        %s272 = scalar_lea.sflag [#allocation6], %s271
        %s273 = sand.u32 %s79, 1
        %s274 = smul.addr %s273, 2
        %s275 = scalar_lea.vmem [#allocation5], %s274
        // Predicated region
        $region45: #{cnn_encoder_forward.3} parent=39 // pred_check
          %p276 = pneg %p92
        $region46: #{cnn_encoder_forward.3} parent=39 // pred_check_branch
          %278 = sbr.rel (%p276) target = $region48
        $region47: #{cnn_encoder_forward.3} parent=39 // pred_region
          %279 = dma.done %s272, 32
        $region48: #{cnn_encoder_forward.3} parent=39 // pred_fallthru
          _
        %s280 = sand.u32 %s24, 1
        %s281 = scalar_lea.sflag [#allocation6], %s280
        %s282 = sand.u32 %s105, 1
        %s283 = smul.addr %s282, 1024
        %s284 = scalar_lea.vmem [#allocation7], %s283
        // Predicated region
        $region49: #{cnn_encoder_forward.3} parent=39 // pred_check
          %p285 = pneg %p118
        $region50: #{cnn_encoder_forward.3} parent=39 // pred_check_branch
          %287 = sbr.rel (%p285) target = $region52
        $region51: #{cnn_encoder_forward.3} parent=39 // pred_region
          %288 = dma.done %s281, 16384
        $region52: #{cnn_encoder_forward.3} parent=39 // pred_fallthru
          _
        // Predicated region
        $region53: #{cnn_encoder_forward.3} parent=39 // pred_check
          %p289 = pneg %p139
        $region54: #{cnn_encoder_forward.3} parent=39 // pred_check_branch
          %291 = sbr.rel (%p289) target = $region56
        $region55: #{cnn_encoder_forward.3} parent=39 // pred_region
          %292 = dma.done [#allocation9], 128
        $region56: #{cnn_encoder_forward.3} parent=39 // pred_fallthru
          _
        %p293 = pneg %p40
        %p294 = pneg %p37
        %s295 = sand.u32 %s53, 1
        %s296 = scalar_lea.sflag [#allocation3], %s295
        %s297 = sand.u32 %s53, 1
        %s298 = smul.addr %s297, 48
        %s299 = scalar_lea.vmem [#allocation2], %s298
        %p300 = pneg %p66
        %p301 = pneg %p63
        %s302 = sand.u32 %s24, 1
        %s303 = scalar_lea.sflag [#allocation6], %s302
        %s304 = sand.u32 %s79, 1
        %s305 = smul.addr %s304, 2
        %s306 = scalar_lea.vmem [#allocation5], %s305
        %p307 = pneg %p92
        %p308 = pneg %p89
        %s309 = sand.u32 %s24, 1
        %s310 = scalar_lea.sflag [#allocation6], %s309
        %s311 = sand.u32 %s105, 1
        %s312 = smul.addr %s311, 1024
        %s313 = scalar_lea.vmem [#allocation7], %s312
        %p314 = pneg %p118
        %p315 = pneg %p115
        %p316 = pneg %p139
        %p317 = pneg %p136
        %p318 = pneg %p160
        %p319 = pneg %p157
        %s320 = smul.u32 2, %s24
        %s321 = smul.u32 2, %s24
        %s322 = smul.u32 32, %s24
        %p324 = scmp.eq.s32.totalorder %s24, 0
        // Predicated region
        $region57: #{cnn_encoder_forward.3} parent=39 // pred_check
          %p325 = pneg %p324
        $region58: #{cnn_encoder_forward.3} parent=39 // pred_check_branch
          %327 = sbr.rel (%p325) target = $region60
        $region59: #{cnn_encoder_forward.3} parent=39 // pred_region
          %v328 = vld [vmem:[#allocation8] sm:$0xff]
          %v330 = vlaneseq
          %v331 = vshrl.u32 %v330, 7
          %v332 = vsub.s32 0, %v331
          %v333 = vrot.slane %v328, %v332
          %v334 = vlaneseq
          %v335 = vshrl.u32 %v334, 7
          %v336 = vsub.s32 1, %v335
          %v337 = vrot.slane %v328, %v336
          %v338 = vlaneseq
          %v339 = vshrl.u32 %v338, 7
          %v340 = vsub.s32 2, %v339
          %v341 = vrot.slane %v328, %v340
          %v342 = vlaneseq
          %v343 = vshrl.u32 %v342, 7
          %v344 = vsub.s32 3, %v343
          %v345 = vrot.slane %v328, %v344
          %v346 = vlaneseq
          %v347 = vshrl.u32 %v346, 7
          %v348 = vsub.s32 4, %v347
          %v349 = vrot.slane %v328, %v348
          %v350 = vlaneseq
          %v351 = vshrl.u32 %v350, 7
          %v352 = vsub.s32 5, %v351
          %v353 = vrot.slane %v328, %v352
          %v354 = vlaneseq
          %v355 = vshrl.u32 %v354, 7
          %v356 = vsub.s32 6, %v355
          %v357 = vrot.slane %v328, %v356
          %v358 = vlaneseq
          %v359 = vshrl.u32 %v358, 7
          %v360 = vsub.s32 7, %v359
          %v361 = vrot.slane %v328, %v360
          %v362 = vcombine.low %v333, %v337
          %v363 = vcombine.low %v341, %v345
          %v365 = vunpack.c.l.s4 1983009808
          %v366 = vunpack.c.0.s8 %v365
          %v367 = vlaneseq
          %v368 = vshrl.u32 %v367, 7
          %v369 = vsub.s32 %v366, %v368
          %v370 = vrot.slane %v362, %v369
          %v372 = vunpack.c.l.s4 1983009808
          %v373 = vunpack.c.0.s8 %v372
          %v374 = vlaneseq
          %v375 = vshrl.u32 %v374, 7
          %v376 = vsub.s32 %v373, %v375
          %v377 = vrot.slane %v363, %v376
          %v378 = vcombine.low %v370, %v377
          %v379 = vcombine.low %v349, %v353
          %v380 = vcombine.low %v357, %v361
          %v382 = vunpack.c.l.s4 1983009808
          %v383 = vunpack.c.0.s8 %v382
          %v384 = vlaneseq
          %v385 = vshrl.u32 %v384, 7
          %v386 = vsub.s32 %v383, %v385
          %v387 = vrot.slane %v379, %v386
          %v389 = vunpack.c.l.s4 1983009808
          %v390 = vunpack.c.0.s8 %v389
          %v391 = vlaneseq
          %v392 = vshrl.u32 %v391, 7
          %v393 = vsub.s32 %v390, %v392
          %v394 = vrot.slane %v380, %v393
          %v395 = vcombine.low %v387, %v394
          %398 = vst [vmem:[#allocation10] sm:$0xff] %v378
          %399 = vst [vmem:[#allocation10 + $0x8] sm:$0xff] %v395
        $region60: #{cnn_encoder_forward.3} parent=39 // pred_fallthru
          _
        %v400 = vld [vmem:[%s0] sm:$0x3]
        %v401 = vpack.c.bf16 %v400, %v400
        %v402 = vld [vmem:[%s266] sm:$0xff]
        %v403 = vld [vmem:[%s266 + $0x8] sm:$0xff]
        %v404 = vld [vmem:[%s266 + $0x10] sm:$0xff]
        %v405 = vld [vmem:[%s266 + $0x18] sm:$0xff]
        %v406 = vld [vmem:[%s266 + $0x20] sm:$0xff]
        %v407 = vld [vmem:[%s266 + $0x28] sm:$0xff]
        %v408 = vld [vmem:[%s275] sm:$0x3]
        %v410 = vlaneseq
        %v411 = vshrl.u32 %v410, 7
        %v412 = vsub.s32 0, %v411
        %v413 = vrot.slane %v408, %v412
        %v414 = vlaneseq
        %v415 = vshrl.u32 %v414, 7
        %v416 = vsub.s32 1, %v415
        %v417 = vrot.slane %v408, %v416
        %v426 = vunpack.c.l.b16 %v402
        %v427 = vunpack.c.h.b16 %v402
        %v428 = vunpack.c.l.b16 %v403
        %v429 = vunpack.c.h.b16 %v403
        %v430 = vunpack.c.l.b16 %v404
        %v431 = vunpack.c.h.b16 %v404
        %v432 = vunpack.c.l.b16 %v405
        %v433 = vunpack.c.h.b16 %v405
        %v434 = vunpack.c.l.b16 %v406
        %v435 = vunpack.c.h.b16 %v406
        %v436 = vunpack.c.l.b16 %v407
        %v437 = vunpack.c.h.b16 %v407
        %v438 = vpack.c.b16 %v428, %v426
        %v439 = vpack.c.b16 %v429, %v427
        %v440 = vpack.c.b16 %v432, %v430
        %v441 = vpack.c.b16 %v433, %v431
        %v442 = vpack.c.b16 %v436, %v434
        %v443 = vpack.c.b16 %v437, %v435
        %vm450 = vcmask 392192
        %v452 = vsel %vm450, %v401, 0
        %454 = vmatprep.subr.bf16.mxu0 0
        %455 = vmatpush1.bf16.msra.mxu0 0
        %456 = vmatprep.subr.bf16.mxu0 0
        %457 = vmatpush1.bf16.msra.mxu0 0
        %458 = vmatprep.subr.bf16.mxu0 0
        %459 = vmatpush1.bf16.msra.mxu0 0
        %460 = vmatprep.subr.bf16.mxu0 0
        %461 = vmatpush1.bf16.msra.mxu0 0
        %462 = vmatprep.subr.bf16.mxu0 0
        %463 = vmatpush1.bf16.msra.mxu0 0
        %464 = vmatprep.subr.bf16.mxu0 %v443
        %465 = vmatpush1.bf16.msra.mxu0 %v442
        %466 = vmatprep.subr.bf16.mxu0 %v441
        %467 = vmatpush1.bf16.msra.mxu0 %v440
        %468 = vmatprep.subr.bf16.mxu0 %v439
        %469 = vmatpush1.bf16.msra.mxu0 %v438
        %470 = vmatprep.subr.bf16.mxu0 0
        %471 = vmatpush2.bf16.msra.mxu0 0
        %472 = vmatprep.subr.bf16.mxu0 0
        %473 = vmatpush2.bf16.msra.mxu0 0
        %474 = vmatprep.subr.bf16.mxu0 0
        %475 = vmatpush2.bf16.msra.mxu0 0
        %476 = vmatprep.subr.bf16.mxu0 0
        %477 = vmatpush2.bf16.msra.mxu0 0
        %478 = vmatprep.subr.bf16.mxu0 0
        %479 = vmatpush2.bf16.msra.mxu0 0
        %480 = vmatprep.subr.bf16.mxu0 0
        %481 = vmatpush2.bf16.msra.mxu0 0
        %482 = vmatprep.subr.bf16.mxu0 0
        %483 = vmatpush2.bf16.msra.mxu0 0
        %484 = vmatprep.subr.bf16.mxu0 0
        %485 = vmatpush2.bf16.msra.mxu0 0
        %486 = vmatprep.mubr.bf16.mxu0 0
        %487 = vmatmul.mubr.bf16.gmra.mxu0 %v452
        %v488 = vpop.f32.mrf.mxu0
        %v489 = vadd.f32 %v413, %v488
        %v490 = vpop.f32.mrf.mxu0
        %v491 = vadd.f32 %v417, %v490
        %v492 = vpop.f32.mrf.mxu0
        %v493 = vpop.f32.mrf.mxu0
        %494 = vdwg.mxu0
        %v495 = vxor.u32 %v489, 2147483648
        %v496 = vxor.u32 %v491, 2147483648
        %v497 = vmul.f32 %v495, 1.442695
        %v498 = vpow.pop %v497
        %v499 = vmul.f32 %v496, 1.442695
        %v500 = vpow.pop %v499
        %v501 = vadd.f32 %v498, 1.0
        %v502 = vadd.f32 %v500, 1.0
        %v503 = vrcp.pop %v501
        %v504 = vmul.f32 1.0, %v503
        %v505 = vrcp.pop %v502
        %v506 = vmul.f32 1.0, %v505
        %v507 = vmul.f32 %v489, %v504
        %v508 = vmul.f32 %v491, %v506
        %v509 = vld [vmem:[#allocation10] sm:$0xff]
        %v510 = vld [vmem:[#allocation10 + $0x8] sm:$0xff]
        %v511 = vpack.c.bf16 %v507, %v507
        %v512 = vpack.c.bf16 %v508, %v508
        %v513 = vld [vmem:[%s284] sm:$0xff]
        %v514 = vld [vmem:[%s284 + $0x8] sm:$0xff]
        %v515 = vld [vmem:[%s284 + $0x10] sm:$0xff]
        %v516 = vld [vmem:[%s284 + $0x18] sm:$0xff]
        %v517 = vld [vmem:[%s284 + $0x20] sm:$0xff]
        %v518 = vld [vmem:[%s284 + $0x28] sm:$0xff]
        %v519 = vld [vmem:[%s284 + $0x30] sm:$0xff]
        %v520 = vld [vmem:[%s284 + $0x38] sm:$0xff]
        %v521 = vld [vmem:[%s284 + $0x40] sm:$0xff]
        %v522 = vld [vmem:[%s284 + $0x48] sm:$0xff]
        %v523 = vld [vmem:[%s284 + $0x50] sm:$0xff]
        %v524 = vld [vmem:[%s284 + $0x58] sm:$0xff]
        %v525 = vld [vmem:[%s284 + $0x60] sm:$0xff]
        %v526 = vld [vmem:[%s284 + $0x68] sm:$0xff]
        %v527 = vld [vmem:[%s284 + $0x70] sm:$0xff]
        %v528 = vld [vmem:[%s284 + $0x78] sm:$0xff]
        %v529 = vld [vmem:[%s284 + $0x80] sm:$0xff]
        %v530 = vld [vmem:[%s284 + $0x88] sm:$0xff]
        %v531 = vld [vmem:[%s284 + $0x90] sm:$0xff]
        %v532 = vld [vmem:[%s284 + $0x98] sm:$0xff]
        %v533 = vld [vmem:[%s284 + $0xa0] sm:$0xff]
        %v534 = vld [vmem:[%s284 + $0xa8] sm:$0xff]
        %v535 = vld [vmem:[%s284 + $0xb0] sm:$0xff]
        %v536 = vld [vmem:[%s284 + $0xb8] sm:$0xff]
        %v537 = vld [vmem:[%s284 + $0xc0] sm:$0xff]
        %v538 = vld [vmem:[%s284 + $0xc8] sm:$0xff]
        %v539 = vld [vmem:[%s284 + $0xd0] sm:$0xff]
        %v540 = vld [vmem:[%s284 + $0xd8] sm:$0xff]
        %v541 = vld [vmem:[%s284 + $0xe0] sm:$0xff]
        %v542 = vld [vmem:[%s284 + $0xe8] sm:$0xff]
        %v543 = vld [vmem:[%s284 + $0xf0] sm:$0xff]
        %v544 = vld [vmem:[%s284 + $0xf8] sm:$0xff]
        %v545 = vld [vmem:[%s284 + $0x100] sm:$0xff]
        %v546 = vld [vmem:[%s284 + $0x108] sm:$0xff]
        %v547 = vld [vmem:[%s284 + $0x110] sm:$0xff]
        %v548 = vld [vmem:[%s284 + $0x118] sm:$0xff]
        %v549 = vld [vmem:[%s284 + $0x120] sm:$0xff]
        %v550 = vld [vmem:[%s284 + $0x128] sm:$0xff]
        %v551 = vld [vmem:[%s284 + $0x130] sm:$0xff]
        %v552 = vld [vmem:[%s284 + $0x138] sm:$0xff]
        %v553 = vld [vmem:[%s284 + $0x140] sm:$0xff]
        %v554 = vld [vmem:[%s284 + $0x148] sm:$0xff]
        %v555 = vld [vmem:[%s284 + $0x150] sm:$0xff]
        %v556 = vld [vmem:[%s284 + $0x158] sm:$0xff]
        %v557 = vld [vmem:[%s284 + $0x160] sm:$0xff]
        %v558 = vld [vmem:[%s284 + $0x168] sm:$0xff]
        %v559 = vld [vmem:[%s284 + $0x170] sm:$0xff]
        %v560 = vld [vmem:[%s284 + $0x178] sm:$0xff]
        %v561 = vld [vmem:[%s284 + $0x180] sm:$0xff]
        %v562 = vld [vmem:[%s284 + $0x188] sm:$0xff]
        %v563 = vld [vmem:[%s284 + $0x190] sm:$0xff]
        %v564 = vld [vmem:[%s284 + $0x198] sm:$0xff]
        %v565 = vld [vmem:[%s284 + $0x1a0] sm:$0xff]
        %v566 = vld [vmem:[%s284 + $0x1a8] sm:$0xff]
        %v567 = vld [vmem:[%s284 + $0x1b0] sm:$0xff]
        %v568 = vld [vmem:[%s284 + $0x1b8] sm:$0xff]
        %v569 = vld [vmem:[%s284 + $0x1c0] sm:$0xff]
        %v570 = vld [vmem:[%s284 + $0x1c8] sm:$0xff]
        %v571 = vld [vmem:[%s284 + $0x1d0] sm:$0xff]
        %v572 = vld [vmem:[%s284 + $0x1d8] sm:$0xff]
        %v573 = vld [vmem:[%s284 + $0x1e0] sm:$0xff]
        %v574 = vld [vmem:[%s284 + $0x1e8] sm:$0xff]
        %v575 = vld [vmem:[%s284 + $0x1f0] sm:$0xff]
        %v576 = vld [vmem:[%s284 + $0x1f8] sm:$0xff]
        %v577 = vld [vmem:[%s284 + $0x200] sm:$0xff]
        %v578 = vld [vmem:[%s284 + $0x208] sm:$0xff]
        %v579 = vld [vmem:[%s284 + $0x210] sm:$0xff]
        %v580 = vld [vmem:[%s284 + $0x218] sm:$0xff]
        %v581 = vld [vmem:[%s284 + $0x220] sm:$0xff]
        %v582 = vld [vmem:[%s284 + $0x228] sm:$0xff]
        %v583 = vld [vmem:[%s284 + $0x230] sm:$0xff]
        %v584 = vld [vmem:[%s284 + $0x238] sm:$0xff]
        %v585 = vld [vmem:[%s284 + $0x240] sm:$0xff]
        %v586 = vld [vmem:[%s284 + $0x248] sm:$0xff]
        %v587 = vld [vmem:[%s284 + $0x250] sm:$0xff]
        %v588 = vld [vmem:[%s284 + $0x258] sm:$0xff]
        %v589 = vld [vmem:[%s284 + $0x260] sm:$0xff]
        %v590 = vld [vmem:[%s284 + $0x268] sm:$0xff]
        %v591 = vld [vmem:[%s284 + $0x270] sm:$0xff]
        %v592 = vld [vmem:[%s284 + $0x278] sm:$0xff]
        %v593 = vld [vmem:[%s284 + $0x280] sm:$0xff]
        %v594 = vld [vmem:[%s284 + $0x288] sm:$0xff]
        %v595 = vld [vmem:[%s284 + $0x290] sm:$0xff]
        %v596 = vld [vmem:[%s284 + $0x298] sm:$0xff]
        %v597 = vld [vmem:[%s284 + $0x2a0] sm:$0xff]
        %v598 = vld [vmem:[%s284 + $0x2a8] sm:$0xff]
        %v599 = vld [vmem:[%s284 + $0x2b0] sm:$0xff]
        %v600 = vld [vmem:[%s284 + $0x2b8] sm:$0xff]
        %v601 = vld [vmem:[%s284 + $0x2c0] sm:$0xff]
        %v602 = vld [vmem:[%s284 + $0x2c8] sm:$0xff]
        %v603 = vld [vmem:[%s284 + $0x2d0] sm:$0xff]
        %v604 = vld [vmem:[%s284 + $0x2d8] sm:$0xff]
        %v605 = vld [vmem:[%s284 + $0x2e0] sm:$0xff]
        %v606 = vld [vmem:[%s284 + $0x2e8] sm:$0xff]
        %v607 = vld [vmem:[%s284 + $0x2f0] sm:$0xff]
        %v608 = vld [vmem:[%s284 + $0x2f8] sm:$0xff]
        %v609 = vld [vmem:[%s284 + $0x300] sm:$0xff]
        %v610 = vld [vmem:[%s284 + $0x308] sm:$0xff]
        %v611 = vld [vmem:[%s284 + $0x310] sm:$0xff]
        %v612 = vld [vmem:[%s284 + $0x318] sm:$0xff]
        %v613 = vld [vmem:[%s284 + $0x320] sm:$0xff]
        %v614 = vld [vmem:[%s284 + $0x328] sm:$0xff]
        %v615 = vld [vmem:[%s284 + $0x330] sm:$0xff]
        %v616 = vld [vmem:[%s284 + $0x338] sm:$0xff]
        %v617 = vld [vmem:[%s284 + $0x340] sm:$0xff]
        %v618 = vld [vmem:[%s284 + $0x348] sm:$0xff]
        %v619 = vld [vmem:[%s284 + $0x350] sm:$0xff]
        %v620 = vld [vmem:[%s284 + $0x358] sm:$0xff]
        %v621 = vld [vmem:[%s284 + $0x360] sm:$0xff]
        %v622 = vld [vmem:[%s284 + $0x368] sm:$0xff]
        %v623 = vld [vmem:[%s284 + $0x370] sm:$0xff]
        %v624 = vld [vmem:[%s284 + $0x378] sm:$0xff]
        %v625 = vld [vmem:[%s284 + $0x380] sm:$0xff]
        %v626 = vld [vmem:[%s284 + $0x388] sm:$0xff]
        %v627 = vld [vmem:[%s284 + $0x390] sm:$0xff]
        %v628 = vld [vmem:[%s284 + $0x398] sm:$0xff]
        %v629 = vld [vmem:[%s284 + $0x3a0] sm:$0xff]
        %v630 = vld [vmem:[%s284 + $0x3a8] sm:$0xff]
        %v631 = vld [vmem:[%s284 + $0x3b0] sm:$0xff]
        %v632 = vld [vmem:[%s284 + $0x3b8] sm:$0xff]
        %v633 = vld [vmem:[%s284 + $0x3c0] sm:$0xff]
        %v634 = vld [vmem:[%s284 + $0x3c8] sm:$0xff]
        %v635 = vld [vmem:[%s284 + $0x3d0] sm:$0xff]
        %v636 = vld [vmem:[%s284 + $0x3d8] sm:$0xff]
        %v637 = vld [vmem:[%s284 + $0x3e0] sm:$0xff]
        %v638 = vld [vmem:[%s284 + $0x3e8] sm:$0xff]
        %v639 = vld [vmem:[%s284 + $0x3f0] sm:$0xff]
        %v640 = vld [vmem:[%s284 + $0x3f8] sm:$0xff]
        %v769 = vunpack.c.l.b16 %v513
        %v770 = vunpack.c.h.b16 %v513
        %v771 = vunpack.c.l.b16 %v514
        %v772 = vunpack.c.h.b16 %v514
        %v773 = vunpack.c.l.b16 %v515
        %v774 = vunpack.c.h.b16 %v515
        %v775 = vunpack.c.l.b16 %v516
        %v776 = vunpack.c.h.b16 %v516
        %v777 = vunpack.c.l.b16 %v517
        %v778 = vunpack.c.h.b16 %v517
        %v779 = vunpack.c.l.b16 %v518
        %v780 = vunpack.c.h.b16 %v518
        %v781 = vunpack.c.l.b16 %v519
        %v782 = vunpack.c.h.b16 %v519
        %v783 = vunpack.c.l.b16 %v520
        %v784 = vunpack.c.h.b16 %v520
        %v785 = vunpack.c.l.b16 %v521
        %v786 = vunpack.c.h.b16 %v521
        %v787 = vunpack.c.l.b16 %v522
        %v788 = vunpack.c.h.b16 %v522
        %v789 = vunpack.c.l.b16 %v523
        %v790 = vunpack.c.h.b16 %v523
        %v791 = vunpack.c.l.b16 %v524
        %v792 = vunpack.c.h.b16 %v524
        %v793 = vunpack.c.l.b16 %v525
        %v794 = vunpack.c.h.b16 %v525
        %v795 = vunpack.c.l.b16 %v526
        %v796 = vunpack.c.h.b16 %v526
        %v797 = vunpack.c.l.b16 %v527
        %v798 = vunpack.c.h.b16 %v527
        %v799 = vunpack.c.l.b16 %v528
        %v800 = vunpack.c.h.b16 %v528
        %v801 = vunpack.c.l.b16 %v529
        %v802 = vunpack.c.h.b16 %v529
        %v803 = vunpack.c.l.b16 %v530
        %v804 = vunpack.c.h.b16 %v530
        %v805 = vunpack.c.l.b16 %v531
        %v806 = vunpack.c.h.b16 %v531
        %v807 = vunpack.c.l.b16 %v532
        %v808 = vunpack.c.h.b16 %v532
        %v809 = vunpack.c.l.b16 %v533
        %v810 = vunpack.c.h.b16 %v533
        %v811 = vunpack.c.l.b16 %v534
        %v812 = vunpack.c.h.b16 %v534
        %v813 = vunpack.c.l.b16 %v535
        %v814 = vunpack.c.h.b16 %v535
        %v815 = vunpack.c.l.b16 %v536
        %v816 = vunpack.c.h.b16 %v536
        %v817 = vunpack.c.l.b16 %v537
        %v818 = vunpack.c.h.b16 %v537
        %v819 = vunpack.c.l.b16 %v538
        %v820 = vunpack.c.h.b16 %v538
        %v821 = vunpack.c.l.b16 %v539
        %v822 = vunpack.c.h.b16 %v539
        %v823 = vunpack.c.l.b16 %v540
        %v824 = vunpack.c.h.b16 %v540
        %v825 = vunpack.c.l.b16 %v541
        %v826 = vunpack.c.h.b16 %v541
        %v827 = vunpack.c.l.b16 %v542
        %v828 = vunpack.c.h.b16 %v542
        %v829 = vunpack.c.l.b16 %v543
        %v830 = vunpack.c.h.b16 %v543
        %v831 = vunpack.c.l.b16 %v544
        %v832 = vunpack.c.h.b16 %v544
        %v833 = vunpack.c.l.b16 %v545
        %v834 = vunpack.c.h.b16 %v545
        %v835 = vunpack.c.l.b16 %v546
        %v836 = vunpack.c.h.b16 %v546
        %v837 = vunpack.c.l.b16 %v547
        %v838 = vunpack.c.h.b16 %v547
        %v839 = vunpack.c.l.b16 %v548
        %v840 = vunpack.c.h.b16 %v548
        %v841 = vunpack.c.l.b16 %v549
        %v842 = vunpack.c.h.b16 %v549
        %v843 = vunpack.c.l.b16 %v550
        %v844 = vunpack.c.h.b16 %v550
        %v845 = vunpack.c.l.b16 %v551
        %v846 = vunpack.c.h.b16 %v551
        %v847 = vunpack.c.l.b16 %v552
        %v848 = vunpack.c.h.b16 %v552
        %v849 = vunpack.c.l.b16 %v553
        %v850 = vunpack.c.h.b16 %v553
        %v851 = vunpack.c.l.b16 %v554
        %v852 = vunpack.c.h.b16 %v554
        %v853 = vunpack.c.l.b16 %v555
        %v854 = vunpack.c.h.b16 %v555
        %v855 = vunpack.c.l.b16 %v556
        %v856 = vunpack.c.h.b16 %v556
        %v857 = vunpack.c.l.b16 %v557
        %v858 = vunpack.c.h.b16 %v557
        %v859 = vunpack.c.l.b16 %v558
        %v860 = vunpack.c.h.b16 %v558
        %v861 = vunpack.c.l.b16 %v559
        %v862 = vunpack.c.h.b16 %v559
        %v863 = vunpack.c.l.b16 %v560
        %v864 = vunpack.c.h.b16 %v560
        %v865 = vunpack.c.l.b16 %v561
        %v866 = vunpack.c.h.b16 %v561
        %v867 = vunpack.c.l.b16 %v562
        %v868 = vunpack.c.h.b16 %v562
        %v869 = vunpack.c.l.b16 %v563
        %v870 = vunpack.c.h.b16 %v563
        %v871 = vunpack.c.l.b16 %v564
        %v872 = vunpack.c.h.b16 %v564
        %v873 = vunpack.c.l.b16 %v565
        %v874 = vunpack.c.h.b16 %v565
        %v875 = vunpack.c.l.b16 %v566
        %v876 = vunpack.c.h.b16 %v566
        %v877 = vunpack.c.l.b16 %v567
        %v878 = vunpack.c.h.b16 %v567
        %v879 = vunpack.c.l.b16 %v568
        %v880 = vunpack.c.h.b16 %v568
        %v881 = vunpack.c.l.b16 %v569
        %v882 = vunpack.c.h.b16 %v569
        %v883 = vunpack.c.l.b16 %v570
        %v884 = vunpack.c.h.b16 %v570
        %v885 = vunpack.c.l.b16 %v571
        %v886 = vunpack.c.h.b16 %v571
        %v887 = vunpack.c.l.b16 %v572
        %v888 = vunpack.c.h.b16 %v572
        %v889 = vunpack.c.l.b16 %v573
        %v890 = vunpack.c.h.b16 %v573
        %v891 = vunpack.c.l.b16 %v574
        %v892 = vunpack.c.h.b16 %v574
        %v893 = vunpack.c.l.b16 %v575
        %v894 = vunpack.c.h.b16 %v575
        %v895 = vunpack.c.l.b16 %v576
        %v896 = vunpack.c.h.b16 %v576
        %v897 = vunpack.c.l.b16 %v577
        %v898 = vunpack.c.h.b16 %v577
        %v899 = vunpack.c.l.b16 %v578
        %v900 = vunpack.c.h.b16 %v578
        %v901 = vunpack.c.l.b16 %v579
        %v902 = vunpack.c.h.b16 %v579
        %v903 = vunpack.c.l.b16 %v580
        %v904 = vunpack.c.h.b16 %v580
        %v905 = vunpack.c.l.b16 %v581
        %v906 = vunpack.c.h.b16 %v581
        %v907 = vunpack.c.l.b16 %v582
        %v908 = vunpack.c.h.b16 %v582
        %v909 = vunpack.c.l.b16 %v583
        %v910 = vunpack.c.h.b16 %v583
        %v911 = vunpack.c.l.b16 %v584
        %v912 = vunpack.c.h.b16 %v584
        %v913 = vunpack.c.l.b16 %v585
        %v914 = vunpack.c.h.b16 %v585
        %v915 = vunpack.c.l.b16 %v586
        %v916 = vunpack.c.h.b16 %v586
        %v917 = vunpack.c.l.b16 %v587
        %v918 = vunpack.c.h.b16 %v587
        %v919 = vunpack.c.l.b16 %v588
        %v920 = vunpack.c.h.b16 %v588
        %v921 = vunpack.c.l.b16 %v589
        %v922 = vunpack.c.h.b16 %v589
        %v923 = vunpack.c.l.b16 %v590
        %v924 = vunpack.c.h.b16 %v590
        %v925 = vunpack.c.l.b16 %v591
        %v926 = vunpack.c.h.b16 %v591
        %v927 = vunpack.c.l.b16 %v592
        %v928 = vunpack.c.h.b16 %v592
        %v929 = vunpack.c.l.b16 %v593
        %v930 = vunpack.c.h.b16 %v593
        %v931 = vunpack.c.l.b16 %v594
        %v932 = vunpack.c.h.b16 %v594
        %v933 = vunpack.c.l.b16 %v595
        %v934 = vunpack.c.h.b16 %v595
        %v935 = vunpack.c.l.b16 %v596
        %v936 = vunpack.c.h.b16 %v596
        %v937 = vunpack.c.l.b16 %v597
        %v938 = vunpack.c.h.b16 %v597
        %v939 = vunpack.c.l.b16 %v598
        %v940 = vunpack.c.h.b16 %v598
        %v941 = vunpack.c.l.b16 %v599
        %v942 = vunpack.c.h.b16 %v599
        %v943 = vunpack.c.l.b16 %v600
        %v944 = vunpack.c.h.b16 %v600
        %v945 = vunpack.c.l.b16 %v601
        %v946 = vunpack.c.h.b16 %v601
        %v947 = vunpack.c.l.b16 %v602
        %v948 = vunpack.c.h.b16 %v602
        %v949 = vunpack.c.l.b16 %v603
        %v950 = vunpack.c.h.b16 %v603
        %v951 = vunpack.c.l.b16 %v604
        %v952 = vunpack.c.h.b16 %v604
        %v953 = vunpack.c.l.b16 %v605
        %v954 = vunpack.c.h.b16 %v605
        %v955 = vunpack.c.l.b16 %v606
        %v956 = vunpack.c.h.b16 %v606
        %v957 = vunpack.c.l.b16 %v607
        %v958 = vunpack.c.h.b16 %v607
        %v959 = vunpack.c.l.b16 %v608
        %v960 = vunpack.c.h.b16 %v608
        %v961 = vunpack.c.l.b16 %v609
        %v962 = vunpack.c.h.b16 %v609
        %v963 = vunpack.c.l.b16 %v610
        %v964 = vunpack.c.h.b16 %v610
        %v965 = vunpack.c.l.b16 %v611
        %v966 = vunpack.c.h.b16 %v611
        %v967 = vunpack.c.l.b16 %v612
        %v968 = vunpack.c.h.b16 %v612
        %v969 = vunpack.c.l.b16 %v613
        %v970 = vunpack.c.h.b16 %v613
        %v971 = vunpack.c.l.b16 %v614
        %v972 = vunpack.c.h.b16 %v614
        %v973 = vunpack.c.l.b16 %v615
        %v974 = vunpack.c.h.b16 %v615
        %v975 = vunpack.c.l.b16 %v616
        %v976 = vunpack.c.h.b16 %v616
        %v977 = vunpack.c.l.b16 %v617
        %v978 = vunpack.c.h.b16 %v617
        %v979 = vunpack.c.l.b16 %v618
        %v980 = vunpack.c.h.b16 %v618
        %v981 = vunpack.c.l.b16 %v619
        %v982 = vunpack.c.h.b16 %v619
        %v983 = vunpack.c.l.b16 %v620
        %v984 = vunpack.c.h.b16 %v620
        %v985 = vunpack.c.l.b16 %v621
        %v986 = vunpack.c.h.b16 %v621
        %v987 = vunpack.c.l.b16 %v622
        %v988 = vunpack.c.h.b16 %v622
        %v989 = vunpack.c.l.b16 %v623
        %v990 = vunpack.c.h.b16 %v623
        %v991 = vunpack.c.l.b16 %v624
        %v992 = vunpack.c.h.b16 %v624
        %v993 = vunpack.c.l.b16 %v625
        %v994 = vunpack.c.h.b16 %v625
        %v995 = vunpack.c.l.b16 %v626
        %v996 = vunpack.c.h.b16 %v626
        %v997 = vunpack.c.l.b16 %v627
        %v998 = vunpack.c.h.b16 %v627
        %v999 = vunpack.c.l.b16 %v628
        %v1000 = vunpack.c.h.b16 %v628
        %v1001 = vunpack.c.l.b16 %v629
        %v1002 = vunpack.c.h.b16 %v629
        %v1003 = vunpack.c.l.b16 %v630
        %v1004 = vunpack.c.h.b16 %v630
        %v1005 = vunpack.c.l.b16 %v631
        %v1006 = vunpack.c.h.b16 %v631
        %v1007 = vunpack.c.l.b16 %v632
        %v1008 = vunpack.c.h.b16 %v632
        %v1009 = vunpack.c.l.b16 %v633
        %v1010 = vunpack.c.h.b16 %v633
        %v1011 = vunpack.c.l.b16 %v634
        %v1012 = vunpack.c.h.b16 %v634
        %v1013 = vunpack.c.l.b16 %v635
        %v1014 = vunpack.c.h.b16 %v635
        %v1015 = vunpack.c.l.b16 %v636
        %v1016 = vunpack.c.h.b16 %v636
        %v1017 = vunpack.c.l.b16 %v637
        %v1018 = vunpack.c.h.b16 %v637
        %v1019 = vunpack.c.l.b16 %v638
        %v1020 = vunpack.c.h.b16 %v638
        %v1021 = vunpack.c.l.b16 %v639
        %v1022 = vunpack.c.h.b16 %v639
        %v1023 = vunpack.c.l.b16 %v640
        %v1024 = vunpack.c.h.b16 %v640
        %v1025 = vpack.c.b16 %v777, %v769
        %v1026 = vpack.c.b16 %v778, %v770
        %v1027 = vpack.c.b16 %v779, %v771
        %v1028 = vpack.c.b16 %v780, %v772
        %v1029 = vpack.c.b16 %v781, %v773
        %v1030 = vpack.c.b16 %v782, %v774
        %v1031 = vpack.c.b16 %v783, %v775
        %v1032 = vpack.c.b16 %v784, %v776
        %v1033 = vpack.c.b16 %v793, %v785
        %v1034 = vpack.c.b16 %v794, %v786
        %v1035 = vpack.c.b16 %v795, %v787
        %v1036 = vpack.c.b16 %v796, %v788
        %v1037 = vpack.c.b16 %v797, %v789
        %v1038 = vpack.c.b16 %v798, %v790
        %v1039 = vpack.c.b16 %v799, %v791
        %v1040 = vpack.c.b16 %v800, %v792
        %v1041 = vpack.c.b16 %v809, %v801
        %v1042 = vpack.c.b16 %v810, %v802
        %v1043 = vpack.c.b16 %v811, %v803
        %v1044 = vpack.c.b16 %v812, %v804
        %v1045 = vpack.c.b16 %v813, %v805
        %v1046 = vpack.c.b16 %v814, %v806
        %v1047 = vpack.c.b16 %v815, %v807
        %v1048 = vpack.c.b16 %v816, %v808
        %v1049 = vpack.c.b16 %v825, %v817
        %v1050 = vpack.c.b16 %v826, %v818
        %v1051 = vpack.c.b16 %v827, %v819
        %v1052 = vpack.c.b16 %v828, %v820
        %v1053 = vpack.c.b16 %v829, %v821
        %v1054 = vpack.c.b16 %v830, %v822
        %v1055 = vpack.c.b16 %v831, %v823
        %v1056 = vpack.c.b16 %v832, %v824
        %v1057 = vpack.c.b16 %v841, %v833
        %v1058 = vpack.c.b16 %v842, %v834
        %v1059 = vpack.c.b16 %v843, %v835
        %v1060 = vpack.c.b16 %v844, %v836
        %v1061 = vpack.c.b16 %v845, %v837
        %v1062 = vpack.c.b16 %v846, %v838
        %v1063 = vpack.c.b16 %v847, %v839
        %v1064 = vpack.c.b16 %v848, %v840
        %v1065 = vpack.c.b16 %v857, %v849
        %v1066 = vpack.c.b16 %v858, %v850
        %v1067 = vpack.c.b16 %v859, %v851
        %v1068 = vpack.c.b16 %v860, %v852
        %v1069 = vpack.c.b16 %v861, %v853
        %v1070 = vpack.c.b16 %v862, %v854
        %v1071 = vpack.c.b16 %v863, %v855
        %v1072 = vpack.c.b16 %v864, %v856
        %v1073 = vpack.c.b16 %v873, %v865
        %v1074 = vpack.c.b16 %v874, %v866
        %v1075 = vpack.c.b16 %v875, %v867
        %v1076 = vpack.c.b16 %v876, %v868
        %v1077 = vpack.c.b16 %v877, %v869
        %v1078 = vpack.c.b16 %v878, %v870
        %v1079 = vpack.c.b16 %v879, %v871
        %v1080 = vpack.c.b16 %v880, %v872
        %v1081 = vpack.c.b16 %v889, %v881
        %v1082 = vpack.c.b16 %v890, %v882
        %v1083 = vpack.c.b16 %v891, %v883
        %v1084 = vpack.c.b16 %v892, %v884
        %v1085 = vpack.c.b16 %v893, %v885
        %v1086 = vpack.c.b16 %v894, %v886
        %v1087 = vpack.c.b16 %v895, %v887
        %v1088 = vpack.c.b16 %v896, %v888
        %v1089 = vpack.c.b16 %v905, %v897
        %v1090 = vpack.c.b16 %v906, %v898
        %v1091 = vpack.c.b16 %v907, %v899
        %v1092 = vpack.c.b16 %v908, %v900
        %v1093 = vpack.c.b16 %v909, %v901
        %v1094 = vpack.c.b16 %v910, %v902
        %v1095 = vpack.c.b16 %v911, %v903
        %v1096 = vpack.c.b16 %v912, %v904
        %v1097 = vpack.c.b16 %v921, %v913
        %v1098 = vpack.c.b16 %v922, %v914
        %v1099 = vpack.c.b16 %v923, %v915
        %v1100 = vpack.c.b16 %v924, %v916
        %v1101 = vpack.c.b16 %v925, %v917
        %v1102 = vpack.c.b16 %v926, %v918
        %v1103 = vpack.c.b16 %v927, %v919
        %v1104 = vpack.c.b16 %v928, %v920
        %v1105 = vpack.c.b16 %v937, %v929
        %v1106 = vpack.c.b16 %v938, %v930
        %v1107 = vpack.c.b16 %v939, %v931
        %v1108 = vpack.c.b16 %v940, %v932
        %v1109 = vpack.c.b16 %v941, %v933
        %v1110 = vpack.c.b16 %v942, %v934
        %v1111 = vpack.c.b16 %v943, %v935
        %v1112 = vpack.c.b16 %v944, %v936
        %v1113 = vpack.c.b16 %v953, %v945
        %v1114 = vpack.c.b16 %v954, %v946
        %v1115 = vpack.c.b16 %v955, %v947
        %v1116 = vpack.c.b16 %v956, %v948
        %v1117 = vpack.c.b16 %v957, %v949
        %v1118 = vpack.c.b16 %v958, %v950
        %v1119 = vpack.c.b16 %v959, %v951
        %v1120 = vpack.c.b16 %v960, %v952
        %v1121 = vpack.c.b16 %v969, %v961
        %v1122 = vpack.c.b16 %v970, %v962
        %v1123 = vpack.c.b16 %v971, %v963
        %v1124 = vpack.c.b16 %v972, %v964
        %v1125 = vpack.c.b16 %v973, %v965
        %v1126 = vpack.c.b16 %v974, %v966
        %v1127 = vpack.c.b16 %v975, %v967
        %v1128 = vpack.c.b16 %v976, %v968
        %v1129 = vpack.c.b16 %v985, %v977
        %v1130 = vpack.c.b16 %v986, %v978
        %v1131 = vpack.c.b16 %v987, %v979
        %v1132 = vpack.c.b16 %v988, %v980
        %v1133 = vpack.c.b16 %v989, %v981
        %v1134 = vpack.c.b16 %v990, %v982
        %v1135 = vpack.c.b16 %v991, %v983
        %v1136 = vpack.c.b16 %v992, %v984
        %v1137 = vpack.c.b16 %v1001, %v993
        %v1138 = vpack.c.b16 %v1002, %v994
        %v1139 = vpack.c.b16 %v1003, %v995
        %v1140 = vpack.c.b16 %v1004, %v996
        %v1141 = vpack.c.b16 %v1005, %v997
        %v1142 = vpack.c.b16 %v1006, %v998
        %v1143 = vpack.c.b16 %v1007, %v999
        %v1144 = vpack.c.b16 %v1008, %v1000
        %v1145 = vpack.c.b16 %v1017, %v1009
        %v1146 = vpack.c.b16 %v1018, %v1010
        %v1147 = vpack.c.b16 %v1019, %v1011
        %v1148 = vpack.c.b16 %v1020, %v1012
        %v1149 = vpack.c.b16 %v1021, %v1013
        %v1150 = vpack.c.b16 %v1022, %v1014
        %v1151 = vpack.c.b16 %v1023, %v1015
        %v1152 = vpack.c.b16 %v1024, %v1016
        %1281 = vmatprep.subr.bf16.mxu0 %v1082
        %1282 = vmatpush1.bf16.msra.mxu0 %v1081
        %1283 = vmatprep.subr.bf16.mxu0 %v1074
        %1284 = vmatpush1.bf16.msra.mxu0 %v1073
        %1285 = vmatprep.subr.bf16.mxu0 %v1066
        %1286 = vmatpush1.bf16.msra.mxu0 %v1065
        %1287 = vmatprep.subr.bf16.mxu0 %v1058
        %1288 = vmatpush1.bf16.msra.mxu0 %v1057
        %1289 = vmatprep.subr.bf16.mxu0 %v1050
        %1290 = vmatpush1.bf16.msra.mxu0 %v1049
        %1291 = vmatprep.subr.bf16.mxu0 %v1042
        %1292 = vmatpush1.bf16.msra.mxu0 %v1041
        %1293 = vmatprep.subr.bf16.mxu0 %v1034
        %1294 = vmatpush1.bf16.msra.mxu0 %v1033
        %1295 = vmatprep.subr.bf16.mxu0 %v1026
        %1296 = vmatpush1.bf16.msra.mxu0 %v1025
        %1297 = vmatprep.subr.bf16.mxu0 %v1146
        %1298 = vmatpush2.bf16.msra.mxu0 %v1145
        %1299 = vmatprep.subr.bf16.mxu0 %v1138
        %1300 = vmatpush2.bf16.msra.mxu0 %v1137
        %1301 = vmatprep.subr.bf16.mxu0 %v1130
        %1302 = vmatpush2.bf16.msra.mxu0 %v1129
        %1303 = vmatprep.subr.bf16.mxu0 %v1122
        %1304 = vmatpush2.bf16.msra.mxu0 %v1121
        %1305 = vmatprep.subr.bf16.mxu0 %v1114
        %1306 = vmatpush2.bf16.msra.mxu0 %v1113
        %1307 = vmatprep.subr.bf16.mxu0 %v1106
        %1308 = vmatpush2.bf16.msra.mxu0 %v1105
        %1309 = vmatprep.subr.bf16.mxu0 %v1098
        %1310 = vmatpush2.bf16.msra.mxu0 %v1097
        %1311 = vmatprep.subr.bf16.mxu0 %v1090
        %1312 = vmatpush2.bf16.msra.mxu0 %v1089
        %1313 = vmatprep.mubr.bf16.mxu0 %v512
        %1314 = vmatmul.mubr.bf16.gmra.mxu0 %v511
        %v1315 = vpop.f32.mrf.mxu0
        %v1316 = vadd.f32 0.0, %v1315
        %v1317 = vpop.f32.mrf.mxu0
        %v1318 = vadd.f32 0.0, %v1317
        %v1319 = vpop.f32.mrf.mxu0
        %v1320 = vpop.f32.mrf.mxu0
        %1321 = vdwg.mxu0
        %1322 = vmatprep.subr.bf16.mxu0 %v1084
        %1323 = vmatpush1.bf16.msra.mxu0 %v1083
        %1324 = vmatprep.subr.bf16.mxu0 %v1076
        %1325 = vmatpush1.bf16.msra.mxu0 %v1075
        %1326 = vmatprep.subr.bf16.mxu0 %v1068
        %1327 = vmatpush1.bf16.msra.mxu0 %v1067
        %1328 = vmatprep.subr.bf16.mxu0 %v1060
        %1329 = vmatpush1.bf16.msra.mxu0 %v1059
        %1330 = vmatprep.subr.bf16.mxu0 %v1052
        %1331 = vmatpush1.bf16.msra.mxu0 %v1051
        %1332 = vmatprep.subr.bf16.mxu0 %v1044
        %1333 = vmatpush1.bf16.msra.mxu0 %v1043
        %1334 = vmatprep.subr.bf16.mxu0 %v1036
        %1335 = vmatpush1.bf16.msra.mxu0 %v1035
        %1336 = vmatprep.subr.bf16.mxu0 %v1028
        %1337 = vmatpush1.bf16.msra.mxu0 %v1027
        %1338 = vmatprep.subr.bf16.mxu0 %v1148
        %1339 = vmatpush2.bf16.msra.mxu0 %v1147
        %1340 = vmatprep.subr.bf16.mxu0 %v1140
        %1341 = vmatpush2.bf16.msra.mxu0 %v1139
        %1342 = vmatprep.subr.bf16.mxu0 %v1132
        %1343 = vmatpush2.bf16.msra.mxu0 %v1131
        %1344 = vmatprep.subr.bf16.mxu0 %v1124
        %1345 = vmatpush2.bf16.msra.mxu0 %v1123
        %1346 = vmatprep.subr.bf16.mxu0 %v1116
        %1347 = vmatpush2.bf16.msra.mxu0 %v1115
        %1348 = vmatprep.subr.bf16.mxu0 %v1108
        %1349 = vmatpush2.bf16.msra.mxu0 %v1107
        %1350 = vmatprep.subr.bf16.mxu0 %v1100
        %1351 = vmatpush2.bf16.msra.mxu0 %v1099
        %1352 = vmatprep.subr.bf16.mxu0 %v1092
        %1353 = vmatpush2.bf16.msra.mxu0 %v1091
        %1354 = vmatprep.mubr.bf16.mxu0 %v512
        %1355 = vmatmul.mubr.bf16.gmra.mxu0 %v511
        %v1356 = vpop.f32.mrf.mxu0
        %v1357 = vadd.f32 0.0, %v1356
        %v1358 = vpop.f32.mrf.mxu0
        %v1359 = vadd.f32 0.0, %v1358
        %v1360 = vpop.f32.mrf.mxu0
        %v1361 = vpop.f32.mrf.mxu0
        %1362 = vdwg.mxu0
        %1363 = vmatprep.subr.bf16.mxu0 %v1086
        %1364 = vmatpush1.bf16.msra.mxu0 %v1085
        %1365 = vmatprep.subr.bf16.mxu0 %v1078
        %1366 = vmatpush1.bf16.msra.mxu0 %v1077
        %1367 = vmatprep.subr.bf16.mxu0 %v1070
        %1368 = vmatpush1.bf16.msra.mxu0 %v1069
        %1369 = vmatprep.subr.bf16.mxu0 %v1062
        %1370 = vmatpush1.bf16.msra.mxu0 %v1061
        %1371 = vmatprep.subr.bf16.mxu0 %v1054
        %1372 = vmatpush1.bf16.msra.mxu0 %v1053
        %1373 = vmatprep.subr.bf16.mxu0 %v1046
        %1374 = vmatpush1.bf16.msra.mxu0 %v1045
        %1375 = vmatprep.subr.bf16.mxu0 %v1038
        %1376 = vmatpush1.bf16.msra.mxu0 %v1037
        %1377 = vmatprep.subr.bf16.mxu0 %v1030
        %1378 = vmatpush1.bf16.msra.mxu0 %v1029
        %1379 = vmatprep.subr.bf16.mxu0 %v1150
        %1380 = vmatpush2.bf16.msra.mxu0 %v1149
        %1381 = vmatprep.subr.bf16.mxu0 %v1142
        %1382 = vmatpush2.bf16.msra.mxu0 %v1141
        %1383 = vmatprep.subr.bf16.mxu0 %v1134
        %1384 = vmatpush2.bf16.msra.mxu0 %v1133
        %1385 = vmatprep.subr.bf16.mxu0 %v1126
        %1386 = vmatpush2.bf16.msra.mxu0 %v1125
        %1387 = vmatprep.subr.bf16.mxu0 %v1118
        %1388 = vmatpush2.bf16.msra.mxu0 %v1117
        %1389 = vmatprep.subr.bf16.mxu0 %v1110
        %1390 = vmatpush2.bf16.msra.mxu0 %v1109
        %1391 = vmatprep.subr.bf16.mxu0 %v1102
        %1392 = vmatpush2.bf16.msra.mxu0 %v1101
        %1393 = vmatprep.subr.bf16.mxu0 %v1094
        %1394 = vmatpush2.bf16.msra.mxu0 %v1093
        %1395 = vmatprep.mubr.bf16.mxu0 %v512
        %1396 = vmatmul.mubr.bf16.gmra.mxu0 %v511
        %v1397 = vpop.f32.mrf.mxu0
        %v1398 = vadd.f32 0.0, %v1397
        %v1399 = vpop.f32.mrf.mxu0
        %v1400 = vadd.f32 0.0, %v1399
        %v1401 = vpop.f32.mrf.mxu0
        %v1402 = vpop.f32.mrf.mxu0
        %1403 = vdwg.mxu0
        %1404 = vmatprep.subr.bf16.mxu0 %v1088
        %1405 = vmatpush1.bf16.msra.mxu0 %v1087
        %1406 = vmatprep.subr.bf16.mxu0 %v1080
        %1407 = vmatpush1.bf16.msra.mxu0 %v1079
        %1408 = vmatprep.subr.bf16.mxu0 %v1072
        %1409 = vmatpush1.bf16.msra.mxu0 %v1071
        %1410 = vmatprep.subr.bf16.mxu0 %v1064
        %1411 = vmatpush1.bf16.msra.mxu0 %v1063
        %1412 = vmatprep.subr.bf16.mxu0 %v1056
        %1413 = vmatpush1.bf16.msra.mxu0 %v1055
        %1414 = vmatprep.subr.bf16.mxu0 %v1048
        %1415 = vmatpush1.bf16.msra.mxu0 %v1047
        %1416 = vmatprep.subr.bf16.mxu0 %v1040
        %1417 = vmatpush1.bf16.msra.mxu0 %v1039
        %1418 = vmatprep.subr.bf16.mxu0 %v1032
        %1419 = vmatpush1.bf16.msra.mxu0 %v1031
        %1420 = vmatprep.subr.bf16.mxu0 %v1152
        %1421 = vmatpush2.bf16.msra.mxu0 %v1151
        %1422 = vmatprep.subr.bf16.mxu0 %v1144
        %1423 = vmatpush2.bf16.msra.mxu0 %v1143
        %1424 = vmatprep.subr.bf16.mxu0 %v1136
        %1425 = vmatpush2.bf16.msra.mxu0 %v1135
        %1426 = vmatprep.subr.bf16.mxu0 %v1128
        %1427 = vmatpush2.bf16.msra.mxu0 %v1127
        %1428 = vmatprep.subr.bf16.mxu0 %v1120
        %1429 = vmatpush2.bf16.msra.mxu0 %v1119
        %1430 = vmatprep.subr.bf16.mxu0 %v1112
        %1431 = vmatpush2.bf16.msra.mxu0 %v1111
        %1432 = vmatprep.subr.bf16.mxu0 %v1104
        %1433 = vmatpush2.bf16.msra.mxu0 %v1103
        %1434 = vmatprep.subr.bf16.mxu0 %v1096
        %1435 = vmatpush2.bf16.msra.mxu0 %v1095
        %1436 = vmatprep.mubr.bf16.mxu0 %v512
        %1437 = vmatmul.mubr.bf16.gmra.mxu0 %v511
        %v1438 = vpop.f32.mrf.mxu0
        %v1439 = vadd.f32 0.0, %v1438
        %v1440 = vpop.f32.mrf.mxu0
        %v1441 = vadd.f32 0.0, %v1440
        %v1442 = vpop.f32.mrf.mxu0
        %v1443 = vpop.f32.mrf.mxu0
        %1444 = vdwg.mxu0
        %v1453 = vcombine.low %v1316, %v1318
        %v1454 = vcombine.low %v1357, %v1359
        %v1456 = vunpack.c.l.s4 1983009808
        %v1457 = vunpack.c.0.s8 %v1456
        %v1458 = vlaneseq
        %v1459 = vshrl.u32 %v1458, 7
        %v1460 = vsub.s32 %v1457, %v1459
        %v1461 = vrot.slane %v1453, %v1460
        %v1463 = vunpack.c.l.s4 1983009808
        %v1464 = vunpack.c.0.s8 %v1463
        %v1465 = vlaneseq
        %v1466 = vshrl.u32 %v1465, 7
        %v1467 = vsub.s32 %v1464, %v1466
        %v1468 = vrot.slane %v1454, %v1467
        %v1469 = vcombine.low %v1461, %v1468
        %v1470 = vcombine.low %v1398, %v1400
        %v1471 = vcombine.low %v1439, %v1441
        %v1473 = vunpack.c.l.s4 1983009808
        %v1474 = vunpack.c.0.s8 %v1473
        %v1475 = vlaneseq
        %v1476 = vshrl.u32 %v1475, 7
        %v1477 = vsub.s32 %v1474, %v1476
        %v1478 = vrot.slane %v1470, %v1477
        %v1480 = vunpack.c.l.s4 1983009808
        %v1481 = vunpack.c.0.s8 %v1480
        %v1482 = vlaneseq
        %v1483 = vshrl.u32 %v1482, 7
        %v1484 = vsub.s32 %v1481, %v1483
        %v1485 = vrot.slane %v1471, %v1484
        %v1486 = vcombine.low %v1478, %v1485
        %v1489 = vadd.f32 %v509, %v1469
        %v1490 = vadd.f32 %v510, %v1486
        %1491 = vst [vmem:[#allocation10] sm:$0xff] %v1489
        %1492 = vst [vmem:[#allocation10 + $0x8] sm:$0xff] %v1490
        // Predicated region
        $region61: #{cnn_encoder_forward.3} parent=39 // pred_check
          %p1493 = pneg %p157
        $region62: #{cnn_encoder_forward.3} parent=39 // pred_check_branch
          %1495 = sbr.rel (%p1493) target = $region64
        $region63: #{cnn_encoder_forward.3} parent=39 // pred_region
          %s1497 = ssub.s32 256, 256
          %1498 = vsyncadd [#allocation4], %s1497
          %s1500 = sshll.u32 [#allocation10], 4
          %s1501 = int_to_ptr.vmem [resolvable:$true] %s1500
          %1503 = dma.vmem_to_hbm [thread:$0]  %s1501, 256, %s5, [#allocation4]
        $region64: #{cnn_encoder_forward.3} parent=39 // pred_fallthru
          _
        // Predicated region
        $region65: #{cnn_encoder_forward.3} parent=39 // pred_check
          %p1504 = pneg %p157
        $region66: #{cnn_encoder_forward.3} parent=39 // pred_check_branch
          %1506 = sbr.rel (%p1504) target = $region68
        $region67: #{cnn_encoder_forward.3} parent=39 // pred_region
          %1507 = dma.done [#allocation4], 256
        $region68: #{cnn_encoder_forward.3} parent=39 // pred_fallthru
          _
      $region40: #{cnn_encoder_forward.3} parent=5 // pred_fallthru
        _
      %p1508 = scmp.le.s32.totalorder 2, %s19
      // Predicated region
      $region69: #{cnn_encoder_forward.3} parent=5 // pred_check
        %p1509 = pneg %p1508
      $region70: #{cnn_encoder_forward.3} parent=5 // pred_check_branch
        %1511 = sbr.rel (%p1509) target = $region72
      $region71: #{cnn_encoder_forward.3} parent=5 // pred_region
        %s1512 = ssub.s32 %s19, 2
      $region72: #{cnn_encoder_forward.3} parent=5 // pred_fallthru
        _
    $region6: #{cnn_encoder_forward.3} parent=1 // loop_footer
      %s23 = sadd.s32 1, %s19
    $region7: #{cnn_encoder_forward.3} parent=1 // loop_footer_branch
      %18 = sbr.rel target = $region3
    $region8: #{cnn_encoder_forward.3} parent=1 // loop_exit
      _
    %1513 = vsyncpa [#allocation3], 1
    %s1514 = scalar_lea.sflag [#allocation3], 1
    %1515 = vsyncpa %s1514, 1
    %1516 = vsyncpa [#allocation6], 1
    %s1517 = scalar_lea.sflag [#allocation6], 1
    %1518 = vsyncpa %s1517, 1
    %1519 = vsyncpa [#allocation9], 1
    %1520 = vsyncpa [#allocation4], 1
    %s1521 = scalar_lea.sflag [#allocation4], 1
    %1522 = vsyncpa %s1521, 1

</llo_original>
